<compile_context>
chip_gen: v7x
topology: tpu7x:2x2x1
jax: 0.10.0
libtpu: 0.0.40
codegen_flags: <defaults>
</compile_context>

<pallas_src>
from functools import partial

import numpy as np
import jax
import jax.numpy as jnp
from jax import lax
from jax.experimental import pallas as pl
from jax.experimental.pallas import tpu as pltpu

NUM_CH_DEC = np.array([32, 32, 64, 128, 256])

COMPUTE_DTYPE = jnp.bfloat16          # HBM / DMA / MXU-input dtype (f32 also works)


def _vmem_limit_bytes():
    """Generation-aware scoped-VMEM budget (v7x: 64 MiB physical; v5e/v6e: 128 MiB)."""
    try:
        cap = int(pltpu.get_tpu_info().vmem_capacity_bytes)
        return max(32 * 1024 * 1024, min(cap * 3 // 4, 96 * 1024 * 1024))
    except Exception:
        return 48 * 1024 * 1024


_VMEM_LIMIT = _vmem_limit_bytes()
_STEP_BUDGET = int(_VMEM_LIMIT * 0.6)     # target per-grid-step VMEM footprint


# ----------------------------------------------------------------------------
# In-kernel helpers (all static-shape jnp ops; Mosaic-friendly patterns)
# ----------------------------------------------------------------------------
def _repeat2_rows(x):
    """Nearest-x2 duplication along axis 0 (outer dim): (H, W, C) -> (2H, W, C)."""
    H, W, C = x.shape
    xe = jnp.concatenate([x[:, None], x[:, None]], axis=1)        # (H, 2, W, C)
    return xe.reshape(2 * H, W, C)


def _repeat2_cols(x):
    """Nearest-x2 duplication along axis 1 (sublane dim): (H, W, C) -> (H, 2W, C)."""
    H, W, C = x.shape
    xe = jnp.concatenate([x[:, :, None, :], x[:, :, None, :]], axis=2)  # (H, W, 2, C)
    return xe.reshape(H, 2 * W, C)


# ----------------------------------------------------------------------------
# Pallas kernel: one TH-row tile of
#   [nearest-x2 upsample ->] [skip concat ->] ReflectionPad(1) -> Conv3x3
#   -> +bias -> ELU / sigmoid
# ----------------------------------------------------------------------------
def _conv3x3_kernel(*refs, TH, Wo, Cs, Cout, upsample, activation, squeeze_out):
    # refs (with skip):    a, a_halo, s, s_halo, wa3, ws3, b, out
    # refs (without skip): a, a_halo,              wa3,      b, out
    if Cs > 0:
        a_ref, ah_ref, s_ref, sh_ref, wa_ref, ws_ref, b_ref, o_ref = refs
    else:
        a_ref, ah_ref, wa_ref, b_ref, o_ref = refs
        s_ref = sh_ref = ws_ref = None

    def pad_cols_reflect(rows):
        # ReflectionPad2d(1) along W: columns [1, 0..W-1, W-2]
        return jnp.concatenate([rows[:, 1:2], rows, rows[:, -2:-1]], axis=1)

    # ---- assemble the (TH+2, Wo+2, Ca) padded (and x2-upsampled) 'a' window --
    a = a_ref[0]                      # (THa, Wa, Ca)  or (TH, Wo, Ca)
    ah = ah_ref[0]                    # (2,   Wa, Ca)  halo rows (pre-reflected/clamped)
    if upsample:
        # halo rows are single up-rows; interior source rows each appear twice.
        rows = jnp.concatenate([ah[0:1], _repeat2_rows(a), ah[1:2]], axis=0)
        cols = _repeat2_cols(rows)                                   # (TH+2, Wo, Ca)
        # reflection pad of the x2-upsampled tensor == clamp of the source cols
        a_pad = jnp.concatenate([cols[:, 0:1], cols, cols[:, -1:]], axis=1)
    else:
        rows = jnp.concatenate([ah[0:1], a, ah[1:2]], axis=0)       # (TH+2, Wo, Ca)
        a_pad = pad_cols_reflect(rows)                               # (TH+2, Wo+2, Ca)

    def fold_dx(xpad):
        # dx im2col once: (TH+2, Wo+2, C) -> (TH+2, Wo, 3C)
        return jnp.concatenate(
            [xpad[:, 0:Wo], xpad[:, 1:Wo + 1], xpad[:, 2:Wo + 2]], axis=-1)

    if squeeze_out:
        # Cout == 1 disp head: VPU multiply + lane reduction keeps the result
        # (TH, Wo) lane-dense and leaves the MXU alone.   wa_ref: (3, 3*Ca)
        cat = fold_dx(a_pad)
        acc = None
        for dy in range(3):
            prod = (cat[dy:dy + TH] * wa_ref[dy]).astype(jnp.float32)
            part = jnp.sum(prod, axis=-1)                            # (TH, Wo)
            acc = part if acc is None else acc + part
    else:
        def conv_part(xpad, w_ref, acc):
            # w_ref: (3, 3*C, Cout);  dy handled by slicing the cheap row axis,
            # accumulator initialised by the first matmul (no zeros+add).
            cat = fold_dx(xpad)
            k3 = cat.shape[-1]
            for dy in range(3):
                lhs = cat[dy:dy + TH].reshape(TH * Wo, k3)
                part = jnp.dot(lhs, w_ref[dy], preferred_element_type=jnp.float32)
                acc = part if acc is None else acc + part
            return acc

        acc = conv_part(a_pad, wa_ref, None)
        if Cs > 0:
            # split-K: conv(concat(up(a), skip)) = up(a) @ Wa + skip @ Ws
            s_rows = jnp.concatenate([sh_ref[0][0:1], s_ref[0], sh_ref[0][1:2]],
                                     axis=0)
            acc = conv_part(pad_cols_reflect(s_rows), ws_ref, acc)

    acc = acc + b_ref[0].astype(jnp.float32)
    if activation == "elu":
        acc = jnp.where(acc > 0, acc, jnp.exp(jnp.minimum(acc, 0.0)) - 1.0)
    elif activation == "sigmoid":
        acc = 1.0 / (1.0 + jnp.exp(-acc))

    if squeeze_out:                   # lane-dense (TH, Wo) store
        o_ref[0] = acc.astype(o_ref.dtype)
    else:
        o_ref[0] = acc.reshape(TH, Wo, Cout).astype(o_ref.dtype)


# ----------------------------------------------------------------------------
# Wrapper-side glue: halo side-tensor (slices/concat only — no XLA gathers)
# ----------------------------------------------------------------------------
def _make_halo(x, t, reflect):
    """Per-row-tile extra rows (one above, one below): (N * (H//t), 2, W, C).

    reflect=True  -> ReflectionPad2d(1) boundary rows (row 1 / row H-2).
    reflect=False -> clamp (pre-upsample tensor: the reflected up-row maps back
                     to the clamped source row).
    """
    N, H, W, C = x.shape
    nR = H // t
    xr = x.reshape(N, nR, t, W, C)
    tops_i = xr[:, :-1, t - 1]            # row r*t - 1  for r = 1..nR-1
    bots_i = xr[:, 1:, 0]                 # row r*t + t  for r = 0..nR-2
    if reflect:
        top0, botL = x[:, 1:2], x[:, H - 2:H - 1]
    else:
        top0, botL = x[:, 0:1], x[:, H - 1:H]
    tops = jnp.concatenate([top0, tops_i], axis=1)     # (N, nR, W, C)
    bots = jnp.concatenate([bots_i, botL], axis=1)     # (N, nR, W, C)
    return jnp.stack([tops, bots], axis=2).reshape(N * nR, 2, W, C)


def _step_footprint(TH, Wo, Ca, Cs, Cout, upsample, in_bytes, out_bytes):
    """Rough per-grid-step VMEM bytes (double-buffered DMA + in-kernel temps)."""
    THa, Wa = (TH // 2, Wo // 2) if upsample else (TH, Wo)
    pad = (TH + 2) * (Wo + 2)
    dma = 2 * (THa * Wa * Ca + 2 * Wa * Ca + 9 * Ca * Cout) * in_bytes
    dma += 2 * TH * Wo * Cout * out_bytes
    if Cs:
        dma += 2 * (TH * Wo * Cs + 2 * Wo * Cs + 9 * Cs * Cout) * in_bytes
    tmp = 7 * pad * Ca * in_bytes              # padded window + 3x im2col + dy operands
    if upsample:
        tmp += (TH + 2) * Wo * Ca * in_bytes   # column-repeated intermediate
    if Cs:
        tmp += 7 * pad * Cs * in_bytes
    if Cout == 1:
        tmp += 4 * pad * Ca * 4                # f32 products for the VPU disp path
    tmp += 3 * TH * Wo * Cout * 4              # f32 accumulator + epilogue temps
    return int(1.25 * (dma + tmp))


def _pick_tile_rows(Ho, N, *, need_even, row_align, footprint):
    cands = [t for t in range(1, Ho + 1)
             if Ho % t == 0
             and (not need_even or t % 2 == 0)
             and (t == Ho or row_align <= 1 or t % row_align == 0)]
    fitting = [t for t in cands if footprint(t) <= _STEP_BUDGET]
    pool = fitting if fitting else cands[:1]            # smallest legal tile fallback
    multi = [t for t in pool if N * (Ho // t) >= 2]     # keep both v7x TCs busy
    return max(multi) if multi else max(pool)


# ----------------------------------------------------------------------------
# Fused conv wrapper
# ----------------------------------------------------------------------------
def conv3x3(x, w, b, *, activation, upsample=False, skip=None,
            out_dtype=None, compute_dtype=None, tile_rows=None):
    """Fused [nearest-x2 upsample ->] [skip concat ->] ReflectionPad2d(1) ->
    Conv3x3 -> +bias -> ELU / sigmoid, NHWC, as one Pallas TPU kernel.

    x:    (N, Ha, Wa, Ca)       pre-upsample activation
    skip: (N, 2Ha, 2Wa, Cs)     optional skip at output resolution (concat'd
                                after the channels of the upsampled x)
    w:    (3, 3, Ca+Cs, Cout)   HWIO weights;  b: (Cout,)
    Returns (N, Ho, Wo, Cout), or a lane-dense (N, Ho, Wo) when Cout == 1.
    """
    cdt = COMPUTE_DTYPE if compute_dtype is None else compute_dtype
    N, Ha, Wa, Ca = x.shape
    Ho, Wo = (2 * Ha, 2 * Wa) if upsample else (Ha, Wa)
    Cs = 0 if skip is None else skip.shape[-1]
    Cout = w.shape[-1]
    assert w.shape == (3, 3, Ca + Cs, Cout), (w.shape, Ca, Cs, Cout)
    squeeze_out = (Cout == 1)
    assert not (squeeze_out and Cs > 0), "disp heads never take a skip"
    out_dtype = cdt if out_dtype is None else out_dtype

    in_bytes = jnp.dtype(cdt).itemsize
    out_bytes = jnp.dtype(out_dtype).itemsize
    if tile_rows is None:
        tile_rows = _pick_tile_rows(
            Ho, N, need_even=upsample, row_align=8 if squeeze_out else 1,
            footprint=lambda t: _step_footprint(t, Wo, Ca, Cs, Cout, upsample,
                                                in_bytes, out_bytes))
    TH = tile_rows
    assert Ho % TH == 0 and (not upsample or TH % 2 == 0), (Ho, TH, upsample)
    nR = Ho // TH
    THa = TH // 2 if upsample else TH

    x = x.astype(cdt)
    ah = _make_halo(x, THa, reflect=not upsample)
    b2 = b.reshape(1, Cout).astype(jnp.float32)

    args = [x, ah]
    in_specs = [
        pl.BlockSpec((1, THa, Wa if not upsample else Wa, Ca),
                     lambda n, r: (n, r, 0, 0)),
        pl.BlockSpec((1, 2, Wa, Ca),
                     lambda n, r, nR=nR: (n * nR + r, 0, 0, 0)),
    ]
    bytes_accessed = (x.size + ah.size) * in_bytes

    if Cs:
        skip = skip.astype(cdt)
        assert skip.shape == (N, Ho, Wo, Cs), (skip.shape, (N, Ho, Wo, Cs))
        sh = _make_halo(skip, TH, reflect=True)
        args += [skip, sh]
        in_specs += [
            pl.BlockSpec((1, TH, Wo, Cs), lambda n, r: (n, r, 0, 0)),
            pl.BlockSpec((1, 2, Wo, Cs), lambda n, r, nR=nR: (n * nR + r, 0, 0, 0)),
        ]
        bytes_accessed += (skip.size + sh.size) * in_bytes

    if squeeze_out:
        wa3 = w[:, :, :, 0].reshape(3, 3 * Ca).astype(cdt)        # (3, 3*Ca)
        args += [wa3]
        in_specs += [pl.BlockSpec((3, 3 * Ca), lambda n, r: (0, 0))]
    else:
        wa3 = w[:, :, :Ca, :].reshape(3, 3 * Ca, Cout).astype(cdt)
        args += [wa3]
        in_specs += [pl.BlockSpec((3, 3 * Ca, Cout), lambda n, r: (0, 0, 0))]
        if Cs:
            ws3 = w[:, :, Ca:, :].reshape(3, 3 * Cs, Cout).astype(cdt)
            args += [ws3]
            in_specs += [pl.BlockSpec((3, 3 * Cs, Cout), lambda n, r: (0, 0, 0))]
            bytes_accessed += ws3.size * in_bytes
    bytes_accessed += wa3.size * in_bytes

    args += [b2]
    in_specs += [pl.BlockSpec((1, Cout), lambda n, r: (0, 0))]
    bytes_accessed += b2.size * 4 + N * Ho * Wo * Cout * out_bytes

    if squeeze_out:
        out_shape = jax.ShapeDtypeStruct((N, Ho, Wo), out_dtype)
        out_specs = pl.BlockSpec((1, TH, Wo), lambda n, r: (n, r, 0))
    else:
        out_shape = jax.ShapeDtypeStruct((N, Ho, Wo, Cout), out_dtype)
        out_specs = pl.BlockSpec((1, TH, Wo, Cout), lambda n, r: (n, r, 0, 0))

    kernel = partial(_conv3x3_kernel, TH=TH, Wo=Wo, Cs=Cs, Cout=Cout,
                     upsample=upsample, activation=activation,
                     squeeze_out=squeeze_out)
    cost = pl.CostEstimate(
        flops=2 * N * Ho * Wo * 9 * (Ca + Cs) * Cout,
        transcendentals=N * Ho * Wo * Cout,
        bytes_accessed=int(bytes_accessed))

    return pl.pallas_call(
        kernel,
        out_shape=out_shape,
        grid=(N, nR),
        in_specs=in_specs,
        out_specs=out_specs,
        compiler_params=pltpu.CompilerParams(
            dimension_semantics=("parallel", "parallel"),
            vmem_limit_bytes=_VMEM_LIMIT),
        cost_estimate=cost,
    )(*args)


# ----------------------------------------------------------------------------
# Parameter construction (deterministic, mirrors DepthDecoder_nano.__init__)
# ----------------------------------------------------------------------------
def _init_conv(key, cin, cout):
    kw, kb = jax.random.split(key)
    w = jax.random.normal(kw, (3, 3, cin, cout), jnp.float32) / np.sqrt(9.0 * cin)
    b = 0.01 * jax.random.normal(kb, (cout,), jnp.float32)
    return w, b


def init_params(key, num_ch_enc, num_output_channels=1, scales=range(4),
                use_skips=True):
    params = {}
    idx = [0]

    def next_key():
        idx[0] += 1
        return jax.random.fold_in(key, idx[0])

    for i in range(4, -1, -1):
        cin = int(num_ch_enc[-1]) if i == 4 else int(NUM_CH_DEC[i + 1])
        params[("upconv", i, 0)] = _init_conv(next_key(), cin, int(NUM_CH_DEC[i]))
        cin = int(NUM_CH_DEC[i])
        if use_skips and i in [4, 3, 2]:
            cin += int(num_ch_enc[i - 1])
        params[("upconv", i, 1)] = _init_conv(next_key(), cin, int(NUM_CH_DEC[i]))
    for s in scales:
        params[("dispconv", s)] = _init_conv(next_key(), int(NUM_CH_DEC[s]),
                                             num_output_channels)
    return params


# ----------------------------------------------------------------------------
# Forward pass (semantics of DepthDecoder_nano.forward)
# ----------------------------------------------------------------------------
def depth_decoder_nano_forward(params, input_features_nchw, y_nchw, frame_id=0,
                               scales=range(4), compute_dtype=None):
    cdt = COMPUTE_DTYPE if compute_dtype is None else compute_dtype
    # boundary transpose: NCHW (PyTorch convention) -> NHWC (kernel layout)
    x = jnp.transpose(input_features_nchw, (0, 2, 3, 1)).astype(cdt)
    y = {k: jnp.transpose(v, (0, 2, 3, 1)).astype(cdt) for k, v in y_nchw.items()}

    outputs = {}
    for i in range(4, -1, -1):
        w, b = params[("upconv", i, 0)]
        x = conv3x3(x, w, b, activation="elu", compute_dtype=cdt)     # ConvBlock

        # skip selection by channel count, exactly as in the reference forward()
        c = x.shape[-1]
        skip = y[6] if c == 256 else y[4] if c == 128 else y[2] if c == 64 else None

        w, b = params[("upconv", i, 1)]
        # fused: nearest-x2 upsample + (optional) skip concat + pad + conv + ELU
        x = conv3x3(x, w, b, activation="elu", upsample=True, skip=skip,
                    compute_dtype=cdt)

        if i in scales:
            w, b = params[("dispconv", i)]
            disp = conv3x3(x, w, b, activation="sigmoid",
                           out_dtype=jnp.float32, compute_dtype=cdt)
            outputs[("disp", frame_id, i)] = disp[:, None, :, :]      # NCHW (N,1,H,W)
    return outputs


# ----------------------------------------------------------------------------
# Pure-JAX reference (correctness checks)
# ----------------------------------------------------------------------------
def _elu(x):
    return jnp.where(x > 0, x, jnp.exp(jnp.minimum(x, 0.0)) - 1.0)


def _ref_conv3x3(x, w, b, activation, upsample=False, skip=None):
    if upsample:
        x = jnp.repeat(jnp.repeat(x, 2, axis=1), 2, axis=2)
    if skip is not None:
        x = jnp.concatenate([x, skip], axis=-1)
    xp = jnp.pad(x, ((0, 0), (1, 1), (1, 1), (0, 0)), mode="reflect")
    out = lax.conv_general_dilated(
        xp, w, window_strides=(1, 1), padding="VALID",
        dimension_numbers=("NHWC", "HWIO", "NHWC"),
        precision=lax.Precision.HIGHEST) + b
    if activation == "elu":
        return _elu(out)
    if activation == "sigmoid":
        return jax.nn.sigmoid(out)
    return out


# ----------------------------------------------------------------------------
if __name__ == "__main__":
    root = jax.random.PRNGKey(0)
    key = lambda i: jax.random.fold_in(root, i)

    def check(got, ref, tol, name):
        got = jnp.asarray(got, jnp.float32)
        got, ref = jax.block_until_ready((got, ref))
        err = float(jnp.max(jnp.abs(got - ref)))
        scale = max(1.0, float(jnp.max(jnp.abs(ref))))
        assert err <= tol * scale, f"{name}: err={err:.4g} scale={scale:.4g}"

    def bf16_round(a):
        return a.astype(jnp.bfloat16).astype(jnp.float32)

    # (A) plain conv (fused reflection pad), f32 compute, multiple row tiles
    xa = jax.random.normal(key(1), (2, 12, 20, 24), jnp.float32)
    wa, ba = _init_conv(key(2), 24, 32)
    got = conv3x3(xa, wa, ba, activation="elu", compute_dtype=jnp.float32,
                  out_dtype=jnp.float32, tile_rows=4)
    check(got, _ref_conv3x3(xa, wa, ba, "elu"), 1e-2, "plain/f32")

    # (B) fused nearest-x2 upsample + skip concat (split-K), bf16 compute
    xb = jax.random.normal(key(3), (2, 6, 10, 16), jnp.float32)
    sb = jax.random.normal(key(4), (2, 12, 20, 8), jnp.float32)
    wb, bb = _init_conv(key(5), 24, 32)
    got = conv3x3(xb, wb, bb, activation="elu", upsample=True, skip=sb,
                  compute_dtype=jnp.bfloat16, out_dtype=jnp.float32, tile_rows=4)
    ref = _ref_conv3x3(bf16_round(xb), bf16_round(wb), bb, "elu",
                       upsample=True, skip=bf16_round(sb))
    check(got, ref, 4e-2, "up+skip/bf16")

    # (C) fused upsample, no skip, bf16 compute
    wc, bc = _init_conv(key(6), 16, 16)
    got = conv3x3(xb, wc, bc, activation="elu", upsample=True,
                  compute_dtype=jnp.bfloat16, out_dtype=jnp.float32, tile_rows=6)
    ref = _ref_conv3x3(bf16_round(xb), bf16_round(wc), bc, "elu", upsample=True)
    check(got, ref, 4e-2, "up/bf16")

    # (D) disp head: Cout == 1, sigmoid, lane-dense squeezed output
    xd = jax.random.normal(key(7), (2, 16, 24, 16), jnp.float32)
    wd, bd = _init_conv(key(8), 16, 1)
    got = conv3x3(xd, wd, bd, activation="sigmoid", compute_dtype=jnp.bfloat16,
                  out_dtype=jnp.float32, tile_rows=8)
    assert got.shape == (2, 16, 24)
    ref = _ref_conv3x3(bf16_round(xd), bf16_round(wd), bd, "sigmoid")[..., 0]
    check(got, ref, 4e-2, "disp/bf16")

    # --- full decoder forward (small but structurally faithful shapes) --------
    num_ch_enc = np.array([16, 16, 16, 16, 32])
    N, H, W = 2, 4, 4
    params = init_params(jax.random.PRNGKey(0), num_ch_enc)

    # PyTorch-style NCHW inputs; skips y[6], y[4], y[2] at 2x/4x/8x spatial
    x_nchw = jax.random.normal(key(10), (N, int(num_ch_enc[-1]), H, W), jnp.float32)
    y = {
        6: jax.random.normal(key(11), (N, int(num_ch_enc[3]), 2 * H, 2 * W), jnp.float32),
        4: jax.random.normal(key(12), (N, int(num_ch_enc[2]), 4 * H, 4 * W), jnp.float32),
        2: jax.random.normal(key(13), (N, int(num_ch_enc[1]), 8 * H, 8 * W), jnp.float32),
    }

    fwd = jax.jit(lambda p, xf, yf: depth_decoder_nano_forward(p, xf, yf, frame_id=0))
    outputs = jax.block_until_ready(fwd(params, x_nchw, y))

    assert outputs[("disp", 0, 3)].shape == (N, 1, 4 * H, 4 * W)
    assert outputs[("disp", 0, 2)].shape == (N, 1, 8 * H, 8 * W)
    assert outputs[("disp", 0, 1)].shape == (N, 1, 16 * H, 16 * W)
    assert outputs[("disp", 0, 0)].shape == (N, 1, 32 * H, 32 * W)
    for v in outputs.values():
        assert bool(jnp.all(jnp.isfinite(v)))
        assert bool(jnp.all((v >= 0.0) & (v <= 1.0)))   # sigmoid range

    print("KERNEL_OK")
</pallas_src>

<mosaic_0001>
module attributes {stable_mosaic.version = 11 : i64} {
  func.func @_conv3x3_kernel(%arg0: i32, %arg1: i32, %arg2: memref<1x4x20x24xf32, #tpu.memory_space<vmem>>, %arg3: memref<1x2x20x24xf32, #tpu.memory_space<vmem>>, %arg4: memref<3x72x32xf32, #tpu.memory_space<vmem>>, %arg5: memref<1x32xf32, #tpu.memory_space<vmem>>, %arg6: memref<1x4x20x32xf32, #tpu.memory_space<vmem>>) attributes {dimension_semantics = [#tpu.dimension_semantics<parallel>, #tpu.dimension_semantics<parallel>], iteration_bounds = array<i64: 2, 3>, scalar_prefetch = 0 : i64, scratch_operands = 0 : i64, tpu.core_type = #tpu.core_type<tc>, window_params = [{transform_indices = @transform_0, window_bounds = array<i64: 1, 4, 20, 24>}, {transform_indices = @transform_1, window_bounds = array<i64: 1, 2, 20, 24>}, {pipeline_mode = #tpu.pipeline_mode<synchronous>, transform_indices = @transform_2, window_bounds = array<i64: 3, 72, 32>}, {pipeline_mode = #tpu.pipeline_mode<synchronous>, transform_indices = @transform_3, window_bounds = array<i64: 1, 32>}, {transform_indices = @transform_4, window_bounds = array<i64: 1, 4, 20, 32>}]} {
    %c0 = arith.constant 0 : index
    %c0_0 = arith.constant 0 : index
    %c0_1 = arith.constant 0 : index
    %c0_2 = arith.constant 0 : index
    %0 = vector.load %arg2[%c0, %c0_0, %c0_1, %c0_2] : memref<1x4x20x24xf32, #tpu.memory_space<vmem>>, vector<1x4x20x24xf32>
    %1 = vector.shape_cast %0 : vector<1x4x20x24xf32> to vector<4x20x24xf32>
    %c0_3 = arith.constant 0 : index
    %c0_4 = arith.constant 0 : index
    %c0_5 = arith.constant 0 : index
    %c0_6 = arith.constant 0 : index
    %2 = vector.load %arg3[%c0_3, %c0_4, %c0_5, %c0_6] : memref<1x2x20x24xf32, #tpu.memory_space<vmem>>, vector<1x2x20x24xf32>
    %3 = vector.shape_cast %2 : vector<1x2x20x24xf32> to vector<2x20x24xf32>
    %4 = vector.extract_strided_slice %3 {offsets = [0, 0, 0], sizes = [1, 20, 24], strides = [1, 1, 1]} : vector<2x20x24xf32> to vector<1x20x24xf32>
    %5 = vector.extract_strided_slice %3 {offsets = [1, 0, 0], sizes = [1, 20, 24], strides = [1, 1, 1]} : vector<2x20x24xf32> to vector<1x20x24xf32>
    %6 = tpu.concatenate %4, %1, %5 in 0 : vector<1x20x24xf32>, vector<4x20x24xf32>, vector<1x20x24xf32> -> vector<6x20x24xf32>
    %7 = vector.extract_strided_slice %6 {offsets = [0, 1, 0], sizes = [6, 1, 24], strides = [1, 1, 1]} : vector<6x20x24xf32> to vector<6x1x24xf32>
    %8 = vector.extract_strided_slice %6 {offsets = [0, 18, 0], sizes = [6, 1, 24], strides = [1, 1, 1]} : vector<6x20x24xf32> to vector<6x1x24xf32>
    %9 = tpu.concatenate %7, %6, %8 in 1 : vector<6x1x24xf32>, vector<6x20x24xf32>, vector<6x1x24xf32> -> vector<6x22x24xf32>
    %10 = vector.extract_strided_slice %9 {offsets = [0, 0, 0], sizes = [6, 20, 24], strides = [1, 1, 1]} : vector<6x22x24xf32> to vector<6x20x24xf32>
    %11 = vector.extract_strided_slice %9 {offsets = [0, 1, 0], sizes = [6, 20, 24], strides = [1, 1, 1]} : vector<6x22x24xf32> to vector<6x20x24xf32>
    %12 = vector.extract_strided_slice %9 {offsets = [0, 2, 0], sizes = [6, 20, 24], strides = [1, 1, 1]} : vector<6x22x24xf32> to vector<6x20x24xf32>
    %13 = tpu.concatenate %10, %11, %12 in 2 : vector<6x20x24xf32>, vector<6x20x24xf32>, vector<6x20x24xf32> -> vector<6x20x72xf32>
    %14 = vector.extract_strided_slice %13 {offsets = [0, 0, 0], sizes = [4, 20, 72], strides = [1, 1, 1]} : vector<6x20x72xf32> to vector<4x20x72xf32>
    %15 = vector.shape_cast %14 : vector<4x20x72xf32> to vector<80x72xf32>
    %c0_7 = arith.constant 0 : index
    %c0_8 = arith.constant 0 : index
    %c0_9 = arith.constant 0 : index
    %16 = vector.load %arg4[%c0_7, %c0_8, %c0_9] : memref<3x72x32xf32, #tpu.memory_space<vmem>>, vector<1x72x32xf32>
    %17 = vector.shape_cast %16 : vector<1x72x32xf32> to vector<72x32xf32>
    %cst = arith.constant dense<0.000000e+00> : vector<80x32xf32>
    %18 = tpu.matmul %15, %17, %cst {dimension_numbers = #tpu.dot_dimension_numbers<[1], [0], [0], [1], [0, 0, 1, 1], [], []>} : vector<80x72xf32>, vector<72x32xf32>, vector<80x32xf32> -> vector<80x32xf32>
    %19 = vector.extract_strided_slice %13 {offsets = [1, 0, 0], sizes = [4, 20, 72], strides = [1, 1, 1]} : vector<6x20x72xf32> to vector<4x20x72xf32>
    %20 = vector.shape_cast %19 : vector<4x20x72xf32> to vector<80x72xf32>
    %c1 = arith.constant 1 : index
    %c0_10 = arith.constant 0 : index
    %c0_11 = arith.constant 0 : index
    %21 = vector.load %arg4[%c1, %c0_10, %c0_11] : memref<3x72x32xf32, #tpu.memory_space<vmem>>, vector<1x72x32xf32>
    %22 = vector.shape_cast %21 : vector<1x72x32xf32> to vector<72x32xf32>
    %cst_12 = arith.constant dense<0.000000e+00> : vector<80x32xf32>
    %23 = tpu.matmul %20, %22, %cst_12 {dimension_numbers = #tpu.dot_dimension_numbers<[1], [0], [0], [1], [0, 0, 1, 1], [], []>} : vector<80x72xf32>, vector<72x32xf32>, vector<80x32xf32> -> vector<80x32xf32>
    %24 = arith.addf %18, %23 : vector<80x32xf32>
    %25 = vector.extract_strided_slice %13 {offsets = [2, 0, 0], sizes = [4, 20, 72], strides = [1, 1, 1]} : vector<6x20x72xf32> to vector<4x20x72xf32>
    %26 = vector.shape_cast %25 : vector<4x20x72xf32> to vector<80x72xf32>
    %c2 = arith.constant 2 : index
    %c0_13 = arith.constant 0 : index
    %c0_14 = arith.constant 0 : index
    %27 = vector.load %arg4[%c2, %c0_13, %c0_14] : memref<3x72x32xf32, #tpu.memory_space<vmem>>, vector<1x72x32xf32>
    %28 = vector.shape_cast %27 : vector<1x72x32xf32> to vector<72x32xf32>
    %cst_15 = arith.constant dense<0.000000e+00> : vector<80x32xf32>
    %29 = tpu.matmul %26, %28, %cst_15 {dimension_numbers = #tpu.dot_dimension_numbers<[1], [0], [0], [1], [0, 0, 1, 1], [], []>} : vector<80x72xf32>, vector<72x32xf32>, vector<80x32xf32> -> vector<80x32xf32>
    %30 = arith.addf %24, %29 : vector<80x32xf32>
    %c0_16 = arith.constant 0 : index
    %c0_17 = arith.constant 0 : index
    %31 = vector.load %arg5[%c0_16, %c0_17] : memref<1x32xf32, #tpu.memory_space<vmem>>, vector<1x32xf32>
    %32 = vector.shape_cast %31 : vector<1x32xf32> to vector<32xf32>
    %33 = vector.shape_cast %32 : vector<32xf32> to vector<1x32xf32>
    %34 = vector.broadcast %33 : vector<1x32xf32> to vector<80x32xf32>
    %35 = arith.addf %30, %34 : vector<80x32xf32>
    %cst_18 = arith.constant 0.000000e+00 : f32
    %36 = vector.broadcast %cst_18 : f32 to vector<80x32xf32>
    %37 = arith.cmpf ogt, %35, %36 : vector<80x32xf32>
    %cst_19 = arith.constant 0.000000e+00 : f32
    %38 = vector.broadcast %cst_19 : f32 to vector<80x32xf32>
    %39 = arith.minimumf %35, %38 : vector<80x32xf32>
    %40 = math.exp %39 : vector<80x32xf32>
    %cst_20 = arith.constant 1.000000e+00 : f32
    %41 = vector.broadcast %cst_20 : f32 to vector<80x32xf32>
    %42 = arith.subf %40, %41 : vector<80x32xf32>
    %43 = arith.select %37, %35, %42 : vector<80x32xi1>, vector<80x32xf32>
    %44 = vector.shape_cast %43 : vector<80x32xf32> to vector<4x20x32xf32>
    %c0_21 = arith.constant 0 : index
    %c0_22 = arith.constant 0 : index
    %c0_23 = arith.constant 0 : index
    %c0_24 = arith.constant 0 : index
    %45 = vector.load %arg6[%c0_21, %c0_22, %c0_23, %c0_24] : memref<1x4x20x32xf32, #tpu.memory_space<vmem>>, vector<1x4x20x32xf32>
    %46 = vector.shape_cast %45 : vector<1x4x20x32xf32> to vector<4x20x32xf32>
    %47 = vector.shape_cast %44 : vector<4x20x32xf32> to vector<1x4x20x32xf32>
    tpu.vector_store %arg6[%c0_21, %c0_22, %c0_23, %c0_24], %47 {strides = array<i32>} : memref<1x4x20x32xf32, #tpu.memory_space<vmem>>, vector<1x4x20x32xf32>,
    return
  }
  func.func @transform_0(%arg0: i32, %arg1: i32) -> (i32, i32, i32, i32) {
    %c0_i32 = arith.constant 0 : i32
    %c0_i32_0 = arith.constant 0 : i32
    %c0_i32_1 = arith.constant 0 : i32
    return %arg0, %arg1, %c0_i32, %c0_i32_0 : i32, i32, i32, i32
  }
  func.func @transform_1(%arg0: i32, %arg1: i32) -> (i32, i32, i32, i32) {
    %c3_i32 = arith.constant 3 : i32
    %0 = arith.muli %arg0, %c3_i32 : i32
    %1 = arith.addi %0, %arg1 : i32
    %c0_i32 = arith.constant 0 : i32
    %c0_i32_0 = arith.constant 0 : i32
    %c0_i32_1 = arith.constant 0 : i32
    %c0_i32_2 = arith.constant 0 : i32
    return %1, %c0_i32, %c0_i32_0, %c0_i32_1 : i32, i32, i32, i32
  }
  func.func @transform_2(%arg0: i32, %arg1: i32) -> (i32, i32, i32) {
    %c0_i32 = arith.constant 0 : i32
    %c0_i32_0 = arith.constant 0 : i32
    %c0_i32_1 = arith.constant 0 : i32
    %c0_i32_2 = arith.constant 0 : i32
    return %c0_i32, %c0_i32_0, %c0_i32_1 : i32, i32, i32
  }
  func.func @transform_3(%arg0: i32, %arg1: i32) -> (i32, i32) {
    %c0_i32 = arith.constant 0 : i32
    %c0_i32_0 = arith.constant 0 : i32
    %c0_i32_1 = arith.constant 0 : i32
    return %c0_i32, %c0_i32_0 : i32, i32
  }
  func.func @transform_4(%arg0: i32, %arg1: i32) -> (i32, i32, i32, i32) {
    %c0_i32 = arith.constant 0 : i32
    %c0_i32_0 = arith.constant 0 : i32
    %c0_i32_1 = arith.constant 0 : i32
    return %arg0, %arg1, %c0_i32, %c0_i32_0 : i32, i32, i32, i32
  }
}

</mosaic_0001>

<llo_original>
// kernel: tpu_custom_call.1
$region0: #{tpu_custom_call.1}
  #allocation0 [shape = 'u32[]', space=smem, size = 0x4, offset = 0x4, fixed_abs, tag = 'smem constant byte address 0x4 - core index']
  #allocation1 [shape = 'u32[144,128]{1,0:T(1,128)}', space=vmem, size = 0x12000, scoped, tag = 'internal scratch']
  %s0 = inlined_call_operand.vmem [shape: f32[2,12,20,24], index: 0, kind: input, shape index: {}]
  %s1 = inlined_call_operand.vmem [shape: f32[6,2,20,24], index: 1, kind: input, shape index: {}]
  %s2 = inlined_call_operand.vmem [shape: f32[3,72,32], index: 2, kind: input, shape index: {}]
  %s3 = inlined_call_operand.vmem [shape: f32[1,32], index: 3, kind: input, shape index: {}]
  %s4 = inlined_call_operand.vmem [shape: f32[2,12,20,32], index: 4, kind: output, shape index: {}]
  %s5 = sld [smem:[#allocation0]]
  $region49: #{tpu_custom_call.1} parent=0
    _
  %s7 = ssub.s32 1, %s5
  %s8 = scalar_select 0, %s7, %s5
  loop: start=0, step=1, limit=8
  $region2: #{tpu_custom_call.1} parent=0 // loop_pre_header
    _
  $region3: #{tpu_custom_call.1} parent=0 // loop_header
    %s10 = sphi 0, %s14
    %p11 = scmp.ge.s32.totalorder %s10, 8
    %s17 = sphi 0, %s29
    %s18 = sphi 0, %s25
    %s19 = sphi 0, %s17
    %s20 = sphi 0, %s18
    %s21 = sphi 0, %s19
    %s22 = sphi 0, %s20
    %s34 = sphi 0, %s36
    %s37 = sphi 0, %s34
    %s38 = sphi 0, %s37
    %s54 = sphi 0, %s38
    %s64 = sphi 0, %s66
    %s67 = sphi 0, %s64
    %s68 = sphi 0, %s67
    %s84 = sphi 0, %s68
    %s88 = sphi 0, %s88
    %s90 = sphi 0, %s88
    %s91 = sphi 0, %s90
    %s105 = sphi 0, %s91
    %s109 = sphi 0, %s109
    %s111 = sphi 0, %s109
    %s112 = sphi 0, %s111
    %s126 = sphi 0, %s112
    %s134 = sphi 0, %s136
    %s137 = sphi 0, %s134
    %s138 = sphi 0, %s137
    %s154 = sphi 0, %s138
  $region4: #{tpu_custom_call.1} parent=0 // loop_header_branch
    %13 = sbr.rel (%p11) target = $region8
  $region5: #{tpu_custom_call.1} parent=0 // loop_body
    %s15 = ssub.s32 %s10, 1
    %s16 = ssub.s32 %s10, 2
    %s23 = sadd.s32 1, %s18
    %p24 = scmp.ge.s32.totalorder %s23, 3
    %s25 = scalar_select %p24, 0, %s23
    %s26 = sadd.s32 1, %s17
    %s27 = scalar_select %p24, %s26, %s17
    %p28 = scmp.ge.s32.totalorder %s27, 2
    %s29 = scalar_select %p28, 0, %s27
    %s30 = ssub.s32 %s17, %s29
    %s31 = ssub.s32 %s18, %s25
    %s32 = sor.u32 %s30, %s31
    %p33 = scmp.eq.s32.totalorder %s32, 0
    %s35 = sadd.s32 %s34, 1
    %s36 = scalar_select %p33, %s34, %s35
    %p39 = pneg %p33
    %p40 = scmp.eq.s32.totalorder %s10, 5
    %p41 = por %p39, %p40
    %p42 = scmp.ne.s32.totalorder %s34, %s37
    %p43 = scmp.eq.s32.totalorder %s10, 0
    %p44 = por %p42, %p43
    %p45 = scmp.ne.s32.totalorder %s34, %s37
    %p46 = scmp.eq.s32.totalorder %s15, 5
    %p47 = por %p45, %p46
    %p48 = scmp.ne.s32.totalorder %s37, %s38
    %p49 = scmp.eq.s32.totalorder %s15, 0
    %p50 = por %p48, %p49
    %p51 = scmp.ne.s32.totalorder %s37, %s38
    %p52 = scmp.eq.s32.totalorder %s16, 5
    %p53 = por %p51, %p52
    %p55 = scmp.ne.s32.totalorder %s38, %s54
    %p56 = scmp.eq.s32.totalorder %s16, 0
    %p57 = por %p55, %p56
    %s58 = smul.u32 %s17, 3
    %s59 = sadd.s32 %s58, %s18
    %s60 = smul.u32 %s29, 3
    %s61 = sadd.s32 %s60, %s25
    %s62 = ssub.s32 %s59, %s61
    %p63 = scmp.eq.s32.totalorder %s62, 0
    %s65 = sadd.s32 %s64, 1
    %s66 = scalar_select %p63, %s64, %s65
    %p69 = pneg %p63
    %p70 = scmp.eq.s32.totalorder %s10, 5
    %p71 = por %p69, %p70
    %p72 = scmp.ne.s32.totalorder %s64, %s67
    %p73 = scmp.eq.s32.totalorder %s10, 0
    %p74 = por %p72, %p73
    %p75 = scmp.ne.s32.totalorder %s64, %s67
    %p76 = scmp.eq.s32.totalorder %s15, 5
    %p77 = por %p75, %p76
    %p78 = scmp.ne.s32.totalorder %s67, %s68
    %p79 = scmp.eq.s32.totalorder %s15, 0
    %p80 = por %p78, %p79
    %p81 = scmp.ne.s32.totalorder %s67, %s68
    %p82 = scmp.eq.s32.totalorder %s16, 5
    %p83 = por %p81, %p82
    %p85 = scmp.ne.s32.totalorder %s68, %s84
    %p86 = scmp.eq.s32.totalorder %s16, 0
    %p87 = por %p85, %p86
    %s89 = sadd.s32 %s88, 1
    %p92 = scmp.eq.s32.totalorder %s10, 5
    %p93 = scmp.ne.s32.totalorder %s88, %s90
    %p94 = scmp.eq.s32.totalorder %s10, 0
    %p95 = por %p93, %p94
    %p96 = scmp.ne.s32.totalorder %s88, %s90
    %p97 = scmp.eq.s32.totalorder %s15, 5
    %p98 = por %p96, %p97
    %p99 = scmp.ne.s32.totalorder %s90, %s91
    %p100 = scmp.eq.s32.totalorder %s15, 0
    %p101 = por %p99, %p100
    %p102 = scmp.ne.s32.totalorder %s90, %s91
    %p103 = scmp.eq.s32.totalorder %s16, 5
    %p104 = por %p102, %p103
    %p106 = scmp.ne.s32.totalorder %s91, %s105
    %p107 = scmp.eq.s32.totalorder %s16, 0
    %p108 = por %p106, %p107
    %s110 = sadd.s32 %s109, 1
    %p113 = scmp.eq.s32.totalorder %s10, 5
    %p114 = scmp.ne.s32.totalorder %s109, %s111
    %p115 = scmp.eq.s32.totalorder %s10, 0
    %p116 = por %p114, %p115
    %p117 = scmp.ne.s32.totalorder %s109, %s111
    %p118 = scmp.eq.s32.totalorder %s15, 5
    %p119 = por %p117, %p118
    %p120 = scmp.ne.s32.totalorder %s111, %s112
    %p121 = scmp.eq.s32.totalorder %s15, 0
    %p122 = por %p120, %p121
    %p123 = scmp.ne.s32.totalorder %s111, %s112
    %p124 = scmp.eq.s32.totalorder %s16, 5
    %p125 = por %p123, %p124
    %p127 = scmp.ne.s32.totalorder %s112, %s126
    %p128 = scmp.eq.s32.totalorder %s16, 0
    %p129 = por %p127, %p128
    %s130 = ssub.s32 %s17, %s29
    %s131 = ssub.s32 %s18, %s25
    %s132 = sor.u32 %s130, %s131
    %p133 = scmp.eq.s32.totalorder %s132, 0
    %s135 = sadd.s32 %s134, 1
    %s136 = scalar_select %p133, %s134, %s135
    %p139 = pneg %p133
    %p140 = scmp.eq.s32.totalorder %s10, 5
    %p141 = por %p139, %p140
    %p142 = scmp.ne.s32.totalorder %s134, %s137
    %p143 = scmp.eq.s32.totalorder %s10, 0
    %p144 = por %p142, %p143
    %p145 = scmp.ne.s32.totalorder %s134, %s137
    %p146 = scmp.eq.s32.totalorder %s15, 5
    %p147 = por %p145, %p146
    %p148 = scmp.ne.s32.totalorder %s137, %s138
    %p149 = scmp.eq.s32.totalorder %s15, 0
    %p150 = por %p148, %p149
    %p151 = scmp.ne.s32.totalorder %s137, %s138
    %p152 = scmp.eq.s32.totalorder %s16, 5
    %p153 = por %p151, %p152
    %p155 = scmp.ne.s32.totalorder %s138, %s154
    %p156 = scmp.eq.s32.totalorder %s16, 0
    %p157 = por %p155, %p156
    %p158 = scmp.le.s32.totalorder 1, %s10
    %p159 = scmp.lt.s32.totalorder %s10, 7
    %p160 = pnand %p158, %p159
    %p161 = pneg %p160
    // Predicated region
    $region9: #{tpu_custom_call.1} parent=5 // pred_check
      _
    $region10: #{tpu_custom_call.1} parent=5 // pred_check_branch
      %163 = sbr.rel (%p160) target = $region12
    $region11: #{tpu_custom_call.1} parent=5 // pred_region
      %s164 = ssub.s32 %s10, 1
      // Predicated region
      $region13: #{tpu_custom_call.1} parent=11 // pred_check
        %p165 = pneg %p101
      $region14: #{tpu_custom_call.1} parent=11 // pred_check_branch
        %167 = sbr.rel (%p165) target = $region16
      $region15: #{tpu_custom_call.1} parent=11 // pred_region
        _
      $region16: #{tpu_custom_call.1} parent=11 // pred_fallthru
        _
      // Predicated region
      $region17: #{tpu_custom_call.1} parent=11 // pred_check
        %p168 = pneg %p122
      $region18: #{tpu_custom_call.1} parent=11 // pred_check_branch
        %170 = sbr.rel (%p168) target = $region20
      $region19: #{tpu_custom_call.1} parent=11 // pred_region
        _
      $region20: #{tpu_custom_call.1} parent=11 // pred_fallthru
        _
    $region12: #{tpu_custom_call.1} parent=5 // pred_fallthru
      _
    %p171 = scmp.lt.s32.totalorder %s10, 6
    // Predicated region
    $region21: #{tpu_custom_call.1} parent=5 // pred_check
      %p172 = pneg %p171
    $region22: #{tpu_custom_call.1} parent=5 // pred_check_branch
      %174 = sbr.rel (%p172) target = $region24
    $region23: #{tpu_custom_call.1} parent=5 // pred_region
      // Predicated region
      $region25: #{tpu_custom_call.1} parent=23 // pred_check
        %p175 = pneg %p44
      $region26: #{tpu_custom_call.1} parent=23 // pred_check_branch
        %177 = sbr.rel (%p175) target = $region28
      $region27: #{tpu_custom_call.1} parent=23 // pred_region
        %s178 = smul.u32 4, %s18
        %p179 = scmp.lt.s32.totalorder %s17, 1
        %s180 = scalar_select %p179, %s17, 1
        %p181 = scmp.lt.s32.totalorder %s178, 11
        %s182 = scalar_select %p181, %s178, 11
        %s183 = smul.addr %s182, 3
        %s184 = smul.addr %s180, 36
        %s185 = sadd.s32 %s183, %s184
        %s186 = smul.addr %s185, 8
        %s187 = scalar_lea.vmem %s0, %s186
        %s188 = smul.u32 4, %s18
      $region28: #{tpu_custom_call.1} parent=23 // pred_fallthru
        _
      // Predicated region
      $region29: #{tpu_custom_call.1} parent=23 // pred_check
        %p189 = pneg %p74
      $region30: #{tpu_custom_call.1} parent=23 // pred_check_branch
        %191 = sbr.rel (%p189) target = $region32
      $region31: #{tpu_custom_call.1} parent=23 // pred_region
        %s192 = smul.u32 %s17, 3
        %s193 = sadd.s32 %s192, %s18
        %p194 = scmp.lt.s32.totalorder %s193, 5
        %s195 = scalar_select %p194, %s193, 5
        %s196 = smul.addr %s195, 6
        %s197 = smul.addr %s196, 8
        %s198 = scalar_lea.vmem %s1, %s197
        %s199 = smul.u32 %s17, 3
        %s200 = sadd.s32 %s199, %s18
      $region32: #{tpu_custom_call.1} parent=23 // pred_fallthru
        _
    $region24: #{tpu_custom_call.1} parent=5 // pred_fallthru
      _
    %p201 = scmp.le.s32.totalorder 1, %s10
    %p202 = scmp.lt.s32.totalorder %s10, 7
    %p203 = pnand %p201, %p202
    %p204 = pneg %p203
    // Predicated region
    $region33: #{tpu_custom_call.1} parent=5 // pred_check
      _
    $region34: #{tpu_custom_call.1} parent=5 // pred_check_branch
      %206 = sbr.rel (%p203) target = $region36
    $region35: #{tpu_custom_call.1} parent=5 // pred_region
      %s207 = ssub.s32 %s10, 1
      %s208 = smul.u32 4, %s20
      %p209 = scmp.lt.s32.totalorder %s19, 1
      %s210 = scalar_select %p209, %s19, 1
      %p211 = scmp.lt.s32.totalorder %s208, 11
      %s212 = scalar_select %p211, %s208, 11
      %s213 = smul.addr %s212, 3
      %s214 = smul.addr %s210, 36
      %s215 = sadd.s32 %s213, %s214
      %s216 = smul.addr %s215, 8
      %s217 = scalar_lea.vmem %s0, %s216
      %p218 = pneg %p50
      %p219 = pneg %p47
      %s220 = smul.u32 %s19, 3
      %s221 = sadd.s32 %s220, %s20
      %p222 = scmp.lt.s32.totalorder %s221, 5
      %s223 = scalar_select %p222, %s221, 5
      %s224 = smul.addr %s223, 6
      %s225 = smul.addr %s224, 8
      %s226 = scalar_lea.vmem %s1, %s225
      %p227 = pneg %p80
      %p228 = pneg %p77
      %p229 = pneg %p101
      %p230 = pneg %p98
      %p231 = pneg %p122
      %p232 = pneg %p119
      %p233 = pneg %p150
      %p234 = pneg %p147
      %s235 = smul.u32 4, %s20
      %p236 = scmp.lt.s32.totalorder %s19, 1
      %s237 = scalar_select %p236, %s19, 1
      %p238 = scmp.lt.s32.totalorder %s235, 11
      %s239 = scalar_select %p238, %s235, 11
      %s240 = smul.addr %s239, 3
      %s241 = smul.addr %s237, 36
      %s242 = sadd.s32 %s240, %s241
      %s243 = smul.addr %s242, 8
      %s244 = scalar_lea.vmem %s4, %s243
      %s245 = smul.u32 4, %s20
      %p246 = scmp.lt.s32.totalorder %s19, 1
      %s247 = scalar_select %p246, %s19, 1
      %p248 = scmp.lt.s32.totalorder %s245, 11
      %s249 = scalar_select %p248, %s245, 11
      %s250 = smul.addr %s249, 3
      %s251 = smul.addr %s247, 36
      %s252 = sadd.s32 %s250, %s251
      %s253 = smul.addr %s252, 8
      %s254 = scalar_lea.vmem %s0, %s253
      %s255 = smul.u32 4, %s20
      %s256 = smul.u32 %s19, 3
      %s257 = sadd.s32 %s256, %s20
      %p258 = scmp.lt.s32.totalorder %s257, 5
      %s259 = scalar_select %p258, %s257, 5
      %s260 = smul.addr %s259, 6
      %s261 = smul.addr %s260, 8
      %s262 = scalar_lea.vmem %s1, %s261
      %s263 = smul.u32 %s19, 3
      %s264 = sadd.s32 %s263, %s20
      %s265 = smul.u32 4, %s20
      %p266 = scmp.lt.s32.totalorder %s19, 1
      %s267 = scalar_select %p266, %s19, 1
      %p268 = scmp.lt.s32.totalorder %s265, 11
      %s269 = scalar_select %p268, %s265, 11
      %s270 = smul.addr %s269, 3
      %s271 = smul.addr %s267, 36
      %s272 = sadd.s32 %s270, %s271
      %s273 = smul.addr %s272, 8
      %s274 = scalar_lea.vmem %s4, %s273
      %s275 = smul.u32 4, %s20
      %v276 = vld [vmem:[%s254] sm:$0xff]
      %v277 = vld [vmem:[%s254 + $0x8] sm:$0xff]
      %v278 = vld [vmem:[%s254 + $0x10] sm:$0xf]
      %v279 = vld [vmem:[%s254 + $0x18] sm:$0xff]
      %v280 = vld [vmem:[%s254 + $0x20] sm:$0xff]
      %v281 = vld [vmem:[%s254 + $0x28] sm:$0xf]
      %v282 = vld [vmem:[%s254 + $0x30] sm:$0xff]
      %v283 = vld [vmem:[%s254 + $0x38] sm:$0xff]
      %v284 = vld [vmem:[%s254 + $0x40] sm:$0xf]
      %v285 = vld [vmem:[%s254 + $0x48] sm:$0xff]
      %v286 = vld [vmem:[%s254 + $0x50] sm:$0xff]
      %v287 = vld [vmem:[%s254 + $0x58] sm:$0xf]
      %v288 = vld [vmem:[%s262] sm:$0xff]
      %v289 = vld [vmem:[%s262 + $0x8] sm:$0xff]
      %v290 = vld [vmem:[%s262 + $0x10] sm:$0xf]
      %v291 = vld [vmem:[%s262 + $0x18] sm:$0xff]
      %v292 = vld [vmem:[%s262 + $0x20] sm:$0xff]
      %v293 = vld [vmem:[%s262 + $0x28] sm:$0xf]
      %v300 = vrot.slane %v288, 1
      %v301 = vrot.slane %v276, 1
      %v302 = vrot.slane %v279, 1
      %v303 = vrot.slane %v282, 1
      %v304 = vrot.slane %v285, 1
      %v305 = vrot.slane %v291, 1
      %vm324 = vcmask 1040384
      %v325 = vrot.slane %v288, 7
      %v326 = vrot.slane %v289, 7
      %v327 = vsel %vm324, %v325, %v326
      %v328 = vrot.slane %v290, 7
      %v329 = vsel %vm324, %v326, %v328
      %v330 = vrot.slane %v276, 7
      %v331 = vrot.slane %v277, 7
      %v332 = vsel %vm324, %v330, %v331
      %v333 = vrot.slane %v278, 7
      %v334 = vsel %vm324, %v331, %v333
      %v335 = vrot.slane %v279, 7
      %v336 = vrot.slane %v280, 7
      %v337 = vsel %vm324, %v335, %v336
      %v338 = vrot.slane %v281, 7
      %v339 = vsel %vm324, %v336, %v338
      %v340 = vrot.slane %v282, 7
      %v341 = vrot.slane %v283, 7
      %v342 = vsel %vm324, %v340, %v341
      %v343 = vrot.slane %v284, 7
      %v344 = vsel %vm324, %v341, %v343
      %v345 = vrot.slane %v285, 7
      %v346 = vrot.slane %v286, 7
      %v347 = vsel %vm324, %v345, %v346
      %v348 = vrot.slane %v287, 7
      %v349 = vsel %vm324, %v346, %v348
      %v350 = vrot.slane %v291, 7
      %v351 = vrot.slane %v292, 7
      %v352 = vsel %vm324, %v350, %v351
      %v353 = vrot.slane %v293, 7
      %v354 = vsel %vm324, %v351, %v353
      %v373 = vrot.slane %v290, 5
      %v374 = vrot.slane %v278, 5
      %v375 = vrot.slane %v281, 5
      %v376 = vrot.slane %v284, 5
      %v377 = vrot.slane %v287, 5
      %v378 = vrot.slane %v293, 5
      %v385 = vsel %vm324, %v300, %v325
      %v386 = vsel %vm324, %v301, %v330
      %v387 = vsel %vm324, %v302, %v335
      %v388 = vsel %vm324, %v303, %v340
      %v389 = vsel %vm324, %v304, %v345
      %v390 = vsel %vm324, %v305, %v350
      %vm391 = vcmask 1044480
      %v392 = vsel %vm391, %v329, %v373
      %v393 = vsel %vm391, %v334, %v374
      %v394 = vsel %vm391, %v339, %v375
      %v395 = vsel %vm391, %v344, %v376
      %v396 = vsel %vm391, %v349, %v377
      %v397 = vsel %vm391, %v354, %v378
      %vm410 = vcmask 1046528
      %v411 = vrot.slane %v385, 1
      %v412 = vrot.slane %v327, 1
      %v413 = vsel %vm410, %v411, %v412
      %v414 = vrot.slane %v392, 1
      %v415 = vsel %vm410, %v412, %v414
      %v416 = vrot.slane %v386, 1
      %v417 = vrot.slane %v332, 1
      %v418 = vsel %vm410, %v416, %v417
      %v419 = vrot.slane %v393, 1
      %v420 = vsel %vm410, %v417, %v419
      %v421 = vrot.slane %v387, 1
      %v422 = vrot.slane %v337, 1
      %v423 = vsel %vm410, %v421, %v422
      %v424 = vrot.slane %v394, 1
      %v425 = vsel %vm410, %v422, %v424
      %v426 = vrot.slane %v388, 1
      %v427 = vrot.slane %v342, 1
      %v428 = vsel %vm410, %v426, %v427
      %v429 = vrot.slane %v395, 1
      %v430 = vsel %vm410, %v427, %v429
      %v431 = vrot.slane %v389, 1
      %v432 = vrot.slane %v347, 1
      %v433 = vsel %vm410, %v431, %v432
      %v434 = vrot.slane %v396, 1
      %v435 = vsel %vm410, %v432, %v434
      %v436 = vrot.slane %v390, 1
      %v437 = vrot.slane %v352, 1
      %v438 = vsel %vm410, %v436, %v437
      %v439 = vrot.slane %v397, 1
      %v440 = vsel %vm410, %v437, %v439
      %441 = vrot.lane.b32.xlu0 %v413, 24
      %v442 = vpop.permute.xlu0 %441
      %443 = vrot.lane.b32.xlu0 %v415, 24
      %v444 = vpop.permute.xlu0 %443
      %445 = vrot.lane.b32.xlu0 %v414, 24
      %v446 = vpop.permute.xlu0 %445
      %447 = vrot.lane.b32.xlu0 %v418, 24
      %v448 = vpop.permute.xlu0 %447
      %449 = vrot.lane.b32.xlu0 %v420, 24
      %v450 = vpop.permute.xlu0 %449
      %451 = vrot.lane.b32.xlu0 %v419, 24
      %v452 = vpop.permute.xlu0 %451
      %453 = vrot.lane.b32.xlu0 %v423, 24
      %v454 = vpop.permute.xlu0 %453
      %455 = vrot.lane.b32.xlu0 %v425, 24
      %v456 = vpop.permute.xlu0 %455
      %457 = vrot.lane.b32.xlu0 %v424, 24
      %v458 = vpop.permute.xlu0 %457
      %459 = vrot.lane.b32.xlu0 %v428, 24
      %v460 = vpop.permute.xlu0 %459
      %461 = vrot.lane.b32.xlu0 %v430, 24
      %v462 = vpop.permute.xlu0 %461
      %463 = vrot.lane.b32.xlu0 %v429, 24
      %v464 = vpop.permute.xlu0 %463
      %465 = vrot.lane.b32.xlu0 %v433, 24
      %v466 = vpop.permute.xlu0 %465
      %467 = vrot.lane.b32.xlu0 %v435, 24
      %v468 = vpop.permute.xlu0 %467
      %469 = vrot.lane.b32.xlu0 %v434, 24
      %v470 = vpop.permute.xlu0 %469
      %471 = vrot.lane.b32.xlu0 %v438, 24
      %v472 = vpop.permute.xlu0 %471
      %473 = vrot.lane.b32.xlu0 %v440, 24
      %v474 = vpop.permute.xlu0 %473
      %475 = vrot.lane.b32.xlu0 %v439, 24
      %v476 = vpop.permute.xlu0 %475
      %vm495 = vcmask 1045504
      %v496 = vrot.slane %v385, 2
      %v497 = vrot.slane %v327, 2
      %v498 = vsel %vm495, %v496, %v497
      %v499 = vrot.slane %v392, 2
      %v500 = vsel %vm495, %v497, %v499
      %v501 = vrot.slane %v386, 2
      %v502 = vrot.slane %v332, 2
      %v503 = vsel %vm495, %v501, %v502
      %v504 = vrot.slane %v393, 2
      %v505 = vsel %vm495, %v502, %v504
      %v506 = vrot.slane %v387, 2
      %v507 = vrot.slane %v337, 2
      %v508 = vsel %vm495, %v506, %v507
      %v509 = vrot.slane %v394, 2
      %v510 = vsel %vm495, %v507, %v509
      %v511 = vrot.slane %v388, 2
      %v512 = vrot.slane %v342, 2
      %v513 = vsel %vm495, %v511, %v512
      %v514 = vrot.slane %v395, 2
      %v515 = vsel %vm495, %v512, %v514
      %v516 = vrot.slane %v389, 2
      %v517 = vrot.slane %v347, 2
      %v518 = vsel %vm495, %v516, %v517
      %v519 = vrot.slane %v396, 2
      %v520 = vsel %vm495, %v517, %v519
      %v521 = vrot.slane %v390, 2
      %v522 = vrot.slane %v352, 2
      %v523 = vsel %vm495, %v521, %v522
      %v524 = vrot.slane %v397, 2
      %v525 = vsel %vm495, %v522, %v524
      %526 = vrot.lane.b32.xlu0 %v498, 48
      %v527 = vpop.permute.xlu0 %526
      %528 = vrot.lane.b32.xlu0 %v500, 48
      %v529 = vpop.permute.xlu0 %528
      %530 = vrot.lane.b32.xlu0 %v499, 48
      %v531 = vpop.permute.xlu0 %530
      %532 = vrot.lane.b32.xlu0 %v503, 48
      %v533 = vpop.permute.xlu0 %532
      %534 = vrot.lane.b32.xlu0 %v505, 48
      %v535 = vpop.permute.xlu0 %534
      %536 = vrot.lane.b32.xlu0 %v504, 48
      %v537 = vpop.permute.xlu0 %536
      %538 = vrot.lane.b32.xlu0 %v508, 48
      %v539 = vpop.permute.xlu0 %538
      %540 = vrot.lane.b32.xlu0 %v510, 48
      %v541 = vpop.permute.xlu0 %540
      %542 = vrot.lane.b32.xlu0 %v509, 48
      %v543 = vpop.permute.xlu0 %542
      %544 = vrot.lane.b32.xlu0 %v513, 48
      %v545 = vpop.permute.xlu0 %544
      %546 = vrot.lane.b32.xlu0 %v515, 48
      %v547 = vpop.permute.xlu0 %546
      %548 = vrot.lane.b32.xlu0 %v514, 48
      %v549 = vpop.permute.xlu0 %548
      %550 = vrot.lane.b32.xlu0 %v518, 48
      %v551 = vpop.permute.xlu0 %550
      %552 = vrot.lane.b32.xlu0 %v520, 48
      %v553 = vpop.permute.xlu0 %552
      %554 = vrot.lane.b32.xlu0 %v519, 48
      %v555 = vpop.permute.xlu0 %554
      %556 = vrot.lane.b32.xlu0 %v523, 48
      %v557 = vpop.permute.xlu0 %556
      %558 = vrot.lane.b32.xlu0 %v525, 48
      %v559 = vpop.permute.xlu0 %558
      %560 = vrot.lane.b32.xlu0 %v524, 48
      %v561 = vpop.permute.xlu0 %560
      %vm580 = vcmask 195584
      %v581 = vsel %vm580, %v385, %v442
      %v582 = vsel %vm580, %v327, %v444
      %v583 = vsel %vm580, %v392, %v446
      %v584 = vsel %vm580, %v386, %v448
      %v585 = vsel %vm580, %v332, %v450
      %v586 = vsel %vm580, %v393, %v452
      %v587 = vsel %vm580, %v387, %v454
      %v588 = vsel %vm580, %v337, %v456
      %v589 = vsel %vm580, %v394, %v458
      %v590 = vsel %vm580, %v388, %v460
      %v591 = vsel %vm580, %v342, %v462
      %v592 = vsel %vm580, %v395, %v464
      %v593 = vsel %vm580, %v389, %v466
      %v594 = vsel %vm580, %v347, %v468
      %v595 = vsel %vm580, %v396, %v470
      %v596 = vsel %vm580, %v390, %v472
      %v597 = vsel %vm580, %v352, %v474
      %v598 = vsel %vm580, %v397, %v476
      %vm599 = vcmask 392192
      %v600 = vsel %vm599, %v581, %v527
      %v601 = vsel %vm599, %v582, %v529
      %v602 = vsel %vm599, %v583, %v531
      %v603 = vsel %vm599, %v584, %v533
      %v604 = vsel %vm599, %v585, %v535
      %v605 = vsel %vm599, %v586, %v537
      %v606 = vsel %vm599, %v587, %v539
      %v607 = vsel %vm599, %v588, %v541
      %v608 = vsel %vm599, %v589, %v543
      %v609 = vsel %vm599, %v590, %v545
      %v610 = vsel %vm599, %v591, %v547
      %v611 = vsel %vm599, %v592, %v549
      %v612 = vsel %vm599, %v593, %v551
      %v613 = vsel %vm599, %v594, %v553
      %v614 = vsel %vm599, %v595, %v555
      %v615 = vsel %vm599, %v596, %v557
      %v616 = vsel %vm599, %v597, %v559
      %v617 = vsel %vm599, %v598, %v561
      %v630 = vcombine.high %v600, %v600
      %v631 = vcombine.high %v601, %v601
      %v632 = vcombine.high %v603, %v603
      %v633 = vcombine.high %v604, %v604
      %v634 = vcombine.high %v606, %v606
      %v635 = vcombine.high %v607, %v607
      %v636 = vcombine.high %v609, %v609
      %v637 = vcombine.high %v610, %v610
      %v638 = vld [vmem:[%s2] sm:$0xff]
      %v639 = vld [vmem:[%s2 + $0x8] sm:$0xff]
      %v640 = vld [vmem:[%s2 + $0x10] sm:$0xff]
      %v641 = vld [vmem:[%s2 + $0x18] sm:$0xff]
      %v642 = vld [vmem:[%s2 + $0x20] sm:$0xff]
      %v643 = vld [vmem:[%s2 + $0x28] sm:$0xff]
      %v644 = vld [vmem:[%s2 + $0x30] sm:$0xff]
      %v645 = vld [vmem:[%s2 + $0x38] sm:$0xff]
      %v646 = vld [vmem:[%s2 + $0x40] sm:$0xff]
      %v650 = vcombine.high %v612, %v612
      %v651 = vcombine.high %v613, %v613
      %s652 = scalar_lea.vmem %s2, 72
      %v653 = vld [vmem:[%s652] sm:$0xff]
      %v654 = vld [vmem:[%s652 + $0x8] sm:$0xff]
      %v655 = vld [vmem:[%s652 + $0x10] sm:$0xff]
      %v656 = vld [vmem:[%s652 + $0x18] sm:$0xff]
      %v657 = vld [vmem:[%s652 + $0x20] sm:$0xff]
      %v658 = vld [vmem:[%s652 + $0x28] sm:$0xff]
      %v659 = vld [vmem:[%s652 + $0x30] sm:$0xff]
      %v660 = vld [vmem:[%s652 + $0x38] sm:$0xff]
      %v661 = vld [vmem:[%s652 + $0x40] sm:$0xff]
      %v662 = vcombine.low %v603, %v632
      %v663 = vcombine.low %v604, %v633
      %v664 = vcombine.low %v605, %v606
      %v665 = vcombine.low %v634, %v607
      %v666 = vcombine.low %v635, %v608
      %v667 = vcombine.low %v609, %v636
      %v668 = vcombine.low %v610, %v637
      %v669 = vcombine.low %v611, %v612
      %v670 = vcombine.low %v650, %v613
      %v671 = vcombine.low %v651, %v614
      %vm672 = vcmask 588800
      %v673 = vsel %vm672, %v662, 0
      %v675 = vsel %vm672, %v663, 0
      %v677 = vsel %vm672, %v664, 0
      %v679 = vsel %vm672, %v665, 0
      %v681 = vsel %vm672, %v666, 0
      %v683 = vsel %vm672, %v667, 0
      %v685 = vsel %vm672, %v668, 0
      %v687 = vsel %vm672, %v669, 0
      %v689 = vsel %vm672, %v670, 0
      %v691 = vsel %vm672, %v671, 0
      %693 = vmatprep.subr.mxu0 0.0
      %694 = vmatpush1.msra.mxu0 %v653
      %695 = vmatprep.subr.mxu0 0.0
      %696 = vmatpush1.msra.mxu0 %v654
      %697 = vmatprep.subr.mxu0 0.0
      %698 = vmatpush1.msra.mxu0 %v655
      %699 = vmatprep.subr.mxu0 0.0
      %700 = vmatpush1.msra.mxu0 %v656
      %701 = vmatprep.subr.mxu0 0.0
      %702 = vmatpush1.msra.mxu0 %v657
      %703 = vmatprep.subr.mxu0 0.0
      %704 = vmatpush1.msra.mxu0 %v658
      %705 = vmatprep.subr.mxu0 0.0
      %706 = vmatpush1.msra.mxu0 %v659
      %707 = vmatprep.subr.mxu0 0.0
      %708 = vmatpush1.msra.mxu0 %v660
      %709 = vmatprep.subr.mxu0 0.0
      %710 = vmatpush1.msra.mxu0 %v661
      %711 = vmatprep.subr.mxu0 0.0
      %712 = vmatpush1.msra.mxu0 0.0
      %713 = vmatprep.subr.mxu0 0.0
      %714 = vmatpush1.msra.mxu0 0.0
      %715 = vmatprep.subr.mxu0 0.0
      %716 = vmatpush1.msra.mxu0 0.0
      %717 = vmatprep.subr.mxu0 0.0
      %718 = vmatpush1.msra.mxu0 0.0
      %719 = vmatprep.subr.mxu0 0.0
      %720 = vmatpush1.msra.mxu0 0.0
      %721 = vmatprep.subr.mxu0 0.0
      %722 = vmatpush1.msra.mxu0 0.0
      %723 = vmatprep.subr.mxu0 0.0
      %724 = vmatpush1.msra.mxu0 0.0
      %725 = vmatprep.subr.mxu0 0.0
      %726 = vmatpush1.msra.mxu0 0.0
      %727 = vmatprep.subr.mxu0 0.0
      %728 = vmatpush1.msra.mxu0 0.0
      %729 = vmatprep.subr.mxu0 0.0
      %730 = vmatpush1.msra.mxu0 0.0
      %731 = vmatprep.subr.mxu0 0.0
      %732 = vmatpush1.msra.mxu0 0.0
      %733 = vmatprep.subr.mxu0 0.0
      %734 = vmatpush1.msra.mxu0 0.0
      %735 = vmatprep.subr.mxu0 0.0
      %736 = vmatpush1.msra.mxu0 0.0
      %737 = vmatprep.subr.mxu0 0.0
      %738 = vmatpush1.msra.mxu0 0.0
      %739 = vmatprep.subr.mxu0 0.0
      %740 = vmatpush1.msra.mxu0 0.0
      %741 = vmatprep.subr.mxu0 0.0
      %742 = vmatpush1.msra.mxu0 0.0
      %743 = vmatprep.subr.mxu0 0.0
      %744 = vmatpush1.msra.mxu0 0.0
      %745 = vmatprep.subr.mxu0 0.0
      %746 = vmatpush1.msra.mxu0 0.0
      %747 = vmatprep.subr.mxu0 0.0
      %748 = vmatpush1.msra.mxu0 0.0
      %749 = vmatprep.subr.mxu0 0.0
      %750 = vmatpush1.msra.mxu0 0.0
      %751 = vmatprep.subr.mxu0 0.0
      %752 = vmatpush1.msra.mxu0 0.0
      %753 = vmatprep.subr.mxu0 0.0
      %754 = vmatpush1.msra.mxu0 0.0
      %755 = vmatprep.subr.mxu0 0.0
      %756 = vmatpush1.msra.mxu0 0.0
      %757 = vmatprep.mubr.f32.mxu0 0.0
      %758 = vmatmul.mubr.f32.gmra.mrb[0].mxu0 %v673
      %v759 = vpop.f32.mrb[0].mxu0
      %v760 = vadd.f32 0.0, %v759
      %v761 = vpop.f32.mrb[0].mxu0
      %762 = vmatprep.mubr.f32.mxu0 0.0
      %763 = vmatmul.mubr.f32.gmra.mrb[0].mxu0 %v675
      %v764 = vpop.f32.mrb[0].mxu0
      %v765 = vadd.f32 0.0, %v764
      %v766 = vpop.f32.mrb[0].mxu0
      %767 = vmatprep.mubr.f32.mxu0 0.0
      %768 = vmatmul.mubr.f32.gmra.mrb[0].mxu0 %v677
      %v769 = vpop.f32.mrb[0].mxu0
      %v770 = vadd.f32 0.0, %v769
      %v771 = vpop.f32.mrb[0].mxu0
      %772 = vmatprep.mubr.f32.mxu0 0.0
      %773 = vmatmul.mubr.f32.gmra.mrb[0].mxu0 %v679
      %v774 = vpop.f32.mrb[0].mxu0
      %v775 = vadd.f32 0.0, %v774
      %v776 = vpop.f32.mrb[0].mxu0
      %777 = vmatprep.mubr.f32.mxu0 0.0
      %778 = vmatmul.mubr.f32.gmra.mrb[0].mxu0 %v681
      %v779 = vpop.f32.mrb[0].mxu0
      %v780 = vadd.f32 0.0, %v779
      %v781 = vpop.f32.mrb[0].mxu0
      %782 = vmatprep.mubr.f32.mxu0 0.0
      %783 = vmatmul.mubr.f32.gmra.mrb[0].mxu0 %v683
      %v784 = vpop.f32.mrb[0].mxu0
      %v785 = vadd.f32 0.0, %v784
      %v786 = vpop.f32.mrb[0].mxu0
      %787 = vmatprep.mubr.f32.mxu0 0.0
      %788 = vmatmul.mubr.f32.gmra.mrb[0].mxu0 %v685
      %v789 = vpop.f32.mrb[0].mxu0
      %v790 = vadd.f32 0.0, %v789
      %v791 = vpop.f32.mrb[0].mxu0
      %792 = vmatprep.mubr.f32.mxu0 0.0
      %793 = vmatmul.mubr.f32.gmra.mrb[0].mxu0 %v687
      %v794 = vpop.f32.mrb[0].mxu0
      %v795 = vadd.f32 0.0, %v794
      %v796 = vpop.f32.mrb[0].mxu0
      %797 = vmatprep.mubr.f32.mxu0 0.0
      %798 = vmatmul.mubr.f32.gmra.mrb[0].mxu0 %v689
      %v799 = vpop.f32.mrb[0].mxu0
      %v800 = vadd.f32 0.0, %v799
      %v801 = vpop.f32.mrb[0].mxu0
      %802 = vmatprep.mubr.f32.mxu0 0.0
      %803 = vmatmul.mubr.f32.gmra.mrb[0].mxu0 %v691
      %v804 = vpop.f32.mrb[0].mxu0
      %v805 = vadd.f32 0.0, %v804
      %v806 = vpop.f32.mrb[0].mxu0
      %807 = vdwg.mxu0
      %v808 = vcombine.low %v600, %v630
      %v809 = vcombine.low %v601, %v631
      %v810 = vcombine.low %v602, %v603
      %v811 = vcombine.low %v632, %v604
      %v812 = vcombine.low %v633, %v605
      %v813 = vcombine.low %v606, %v634
      %v814 = vcombine.low %v607, %v635
      %v815 = vcombine.low %v608, %v609
      %v816 = vcombine.low %v636, %v610
      %v817 = vcombine.low %v637, %v611
      %v818 = vsel %vm672, %v808, 0
      %v820 = vsel %vm672, %v809, 0
      %v822 = vsel %vm672, %v810, 0
      %v824 = vsel %vm672, %v811, 0
      %v826 = vsel %vm672, %v812, 0
      %v828 = vsel %vm672, %v813, 0
      %v830 = vsel %vm672, %v814, 0
      %v832 = vsel %vm672, %v815, 0
      %v834 = vsel %vm672, %v816, 0
      %v836 = vsel %vm672, %v817, 0
      %838 = vmatprep.subr.mxu0 0.0
      %839 = vmatpush1.msra.mxu0 %v638
      %840 = vmatprep.subr.mxu0 0.0
      %841 = vmatpush1.msra.mxu0 %v639
      %842 = vmatprep.subr.mxu0 0.0
      %843 = vmatpush1.msra.mxu0 %v640
      %844 = vmatprep.subr.mxu0 0.0
      %845 = vmatpush1.msra.mxu0 %v641
      %846 = vmatprep.subr.mxu0 0.0
      %847 = vmatpush1.msra.mxu0 %v642
      %848 = vmatprep.subr.mxu0 0.0
      %849 = vmatpush1.msra.mxu0 %v643
      %850 = vmatprep.subr.mxu0 0.0
      %851 = vmatpush1.msra.mxu0 %v644
      %852 = vmatprep.subr.mxu0 0.0
      %853 = vmatpush1.msra.mxu0 %v645
      %854 = vmatprep.subr.mxu0 0.0
      %855 = vmatpush1.msra.mxu0 %v646
      %856 = vmatprep.subr.mxu0 0.0
      %857 = vmatpush1.msra.mxu0 0.0
      %858 = vmatprep.subr.mxu0 0.0
      %859 = vmatpush1.msra.mxu0 0.0
      %860 = vmatprep.subr.mxu0 0.0
      %861 = vmatpush1.msra.mxu0 0.0
      %862 = vmatprep.subr.mxu0 0.0
      %863 = vmatpush1.msra.mxu0 0.0
      %864 = vmatprep.subr.mxu0 0.0
      %865 = vmatpush1.msra.mxu0 0.0
      %866 = vmatprep.subr.mxu0 0.0
      %867 = vmatpush1.msra.mxu0 0.0
      %868 = vmatprep.subr.mxu0 0.0
      %869 = vmatpush1.msra.mxu0 0.0
      %870 = vmatprep.subr.mxu0 0.0
      %871 = vmatpush1.msra.mxu0 0.0
      %872 = vmatprep.subr.mxu0 0.0
      %873 = vmatpush1.msra.mxu0 0.0
      %874 = vmatprep.subr.mxu0 0.0
      %875 = vmatpush1.msra.mxu0 0.0
      %876 = vmatprep.subr.mxu0 0.0
      %877 = vmatpush1.msra.mxu0 0.0
      %878 = vmatprep.subr.mxu0 0.0
      %879 = vmatpush1.msra.mxu0 0.0
      %880 = vmatprep.subr.mxu0 0.0
      %881 = vmatpush1.msra.mxu0 0.0
      %882 = vmatprep.subr.mxu0 0.0
      %883 = vmatpush1.msra.mxu0 0.0
      %884 = vmatprep.subr.mxu0 0.0
      %885 = vmatpush1.msra.mxu0 0.0
      %886 = vmatprep.subr.mxu0 0.0
      %887 = vmatpush1.msra.mxu0 0.0
      %888 = vmatprep.subr.mxu0 0.0
      %889 = vmatpush1.msra.mxu0 0.0
      %890 = vmatprep.subr.mxu0 0.0
      %891 = vmatpush1.msra.mxu0 0.0
      %892 = vmatprep.subr.mxu0 0.0
      %893 = vmatpush1.msra.mxu0 0.0
      %894 = vmatprep.subr.mxu0 0.0
      %895 = vmatpush1.msra.mxu0 0.0
      %896 = vmatprep.subr.mxu0 0.0
      %897 = vmatpush1.msra.mxu0 0.0
      %898 = vmatprep.subr.mxu0 0.0
      %899 = vmatpush1.msra.mxu0 0.0
      %900 = vmatprep.subr.mxu0 0.0
      %901 = vmatpush1.msra.mxu0 0.0
      %902 = vmatprep.mubr.f32.mxu0 0.0
      %903 = vmatmul.mubr.f32.gmra.mrb[0].mxu0 %v818
      %v904 = vpop.f32.mrb[0].mxu0
      %v905 = vadd.f32 %v760, %v904
      %v906 = vpop.f32.mrb[0].mxu0
      %907 = vmatprep.mubr.f32.mxu0 0.0
      %908 = vmatmul.mubr.f32.gmra.mrb[0].mxu0 %v820
      %v909 = vpop.f32.mrb[0].mxu0
      %v910 = vadd.f32 %v765, %v909
      %v911 = vpop.f32.mrb[0].mxu0
      %912 = vmatprep.mubr.f32.mxu0 0.0
      %913 = vmatmul.mubr.f32.gmra.mrb[0].mxu0 %v822
      %v914 = vpop.f32.mrb[0].mxu0
      %v915 = vadd.f32 %v770, %v914
      %v916 = vpop.f32.mrb[0].mxu0
      %917 = vmatprep.mubr.f32.mxu0 0.0
      %918 = vmatmul.mubr.f32.gmra.mrb[0].mxu0 %v824
      %v919 = vpop.f32.mrb[0].mxu0
      %v920 = vadd.f32 %v775, %v919
      %v921 = vpop.f32.mrb[0].mxu0
      %922 = vmatprep.mubr.f32.mxu0 0.0
      %923 = vmatmul.mubr.f32.gmra.mrb[0].mxu0 %v826
      %v924 = vpop.f32.mrb[0].mxu0
      %v925 = vadd.f32 %v780, %v924
      %v926 = vpop.f32.mrb[0].mxu0
      %927 = vmatprep.mubr.f32.mxu0 0.0
      %928 = vmatmul.mubr.f32.gmra.mrb[0].mxu0 %v828
      %v929 = vpop.f32.mrb[0].mxu0
      %v930 = vadd.f32 %v785, %v929
      %v931 = vpop.f32.mrb[0].mxu0
      %932 = vmatprep.mubr.f32.mxu0 0.0
      %933 = vmatmul.mubr.f32.gmra.mrb[0].mxu0 %v830
      %v934 = vpop.f32.mrb[0].mxu0
      %v935 = vadd.f32 %v790, %v934
      %v936 = vpop.f32.mrb[0].mxu0
      %937 = vmatprep.mubr.f32.mxu0 0.0
      %938 = vmatmul.mubr.f32.gmra.mrb[0].mxu0 %v832
      %v939 = vpop.f32.mrb[0].mxu0
      %v940 = vadd.f32 %v795, %v939
      %v941 = vpop.f32.mrb[0].mxu0
      %942 = vmatprep.mubr.f32.mxu0 0.0
      %943 = vmatmul.mubr.f32.gmra.mrb[0].mxu0 %v834
      %v944 = vpop.f32.mrb[0].mxu0
      %v945 = vadd.f32 %v800, %v944
      %v946 = vpop.f32.mrb[0].mxu0
      %947 = vmatprep.mubr.f32.mxu0 0.0
      %948 = vmatmul.mubr.f32.gmra.mrb[0].mxu0 %v836
      %v949 = vpop.f32.mrb[0].mxu0
      %v950 = vadd.f32 %v805, %v949
      %v951 = vpop.f32.mrb[0].mxu0
      %952 = vdwg.mxu0
      %v956 = vcombine.high %v615, %v615
      %v957 = vcombine.high %v616, %v616
      %s958 = scalar_lea.vmem %s2, 144
      %v959 = vld [vmem:[%s958] sm:$0xff]
      %v960 = vld [vmem:[%s958 + $0x8] sm:$0xff]
      %v961 = vld [vmem:[%s958 + $0x10] sm:$0xff]
      %v962 = vld [vmem:[%s958 + $0x18] sm:$0xff]
      %v963 = vld [vmem:[%s958 + $0x20] sm:$0xff]
      %v964 = vld [vmem:[%s958 + $0x28] sm:$0xff]
      %v965 = vld [vmem:[%s958 + $0x30] sm:$0xff]
      %v966 = vld [vmem:[%s958 + $0x38] sm:$0xff]
      %v967 = vld [vmem:[%s958 + $0x40] sm:$0xff]
      %v968 = vcombine.low %v612, %v650
      %v969 = vcombine.low %v613, %v651
      %v970 = vcombine.low %v614, %v615
      %v971 = vcombine.low %v956, %v616
      %v972 = vcombine.low %v957, %v617
      %v973 = vsel %vm672, %v968, 0
      %v975 = vsel %vm672, %v969, 0
      %v977 = vsel %vm672, %v970, 0
      %v979 = vsel %vm672, %v971, 0
      %v981 = vsel %vm672, %v972, 0
      %983 = vmatprep.subr.mxu0 0.0
      %984 = vmatpush1.msra.mxu0 %v959
      %985 = vmatprep.subr.mxu0 0.0
      %986 = vmatpush1.msra.mxu0 %v960
      %987 = vmatprep.subr.mxu0 0.0
      %988 = vmatpush1.msra.mxu0 %v961
      %989 = vmatprep.subr.mxu0 0.0
      %990 = vmatpush1.msra.mxu0 %v962
      %991 = vmatprep.subr.mxu0 0.0
      %992 = vmatpush1.msra.mxu0 %v963
      %993 = vmatprep.subr.mxu0 0.0
      %994 = vmatpush1.msra.mxu0 %v964
      %995 = vmatprep.subr.mxu0 0.0
      %996 = vmatpush1.msra.mxu0 %v965
      %997 = vmatprep.subr.mxu0 0.0
      %998 = vmatpush1.msra.mxu0 %v966
      %999 = vmatprep.subr.mxu0 0.0
      %1000 = vmatpush1.msra.mxu0 %v967
      %1001 = vmatprep.subr.mxu0 0.0
      %1002 = vmatpush1.msra.mxu0 0.0
      %1003 = vmatprep.subr.mxu0 0.0
      %1004 = vmatpush1.msra.mxu0 0.0
      %1005 = vmatprep.subr.mxu0 0.0
      %1006 = vmatpush1.msra.mxu0 0.0
      %1007 = vmatprep.subr.mxu0 0.0
      %1008 = vmatpush1.msra.mxu0 0.0
      %1009 = vmatprep.subr.mxu0 0.0
      %1010 = vmatpush1.msra.mxu0 0.0
      %1011 = vmatprep.subr.mxu0 0.0
      %1012 = vmatpush1.msra.mxu0 0.0
      %1013 = vmatprep.subr.mxu0 0.0
      %1014 = vmatpush1.msra.mxu0 0.0
      %1015 = vmatprep.subr.mxu0 0.0
      %1016 = vmatpush1.msra.mxu0 0.0
      %1017 = vmatprep.subr.mxu0 0.0
      %1018 = vmatpush1.msra.mxu0 0.0
      %1019 = vmatprep.subr.mxu0 0.0
      %1020 = vmatpush1.msra.mxu0 0.0
      %1021 = vmatprep.subr.mxu0 0.0
      %1022 = vmatpush1.msra.mxu0 0.0
      %1023 = vmatprep.subr.mxu0 0.0
      %1024 = vmatpush1.msra.mxu0 0.0
      %1025 = vmatprep.subr.mxu0 0.0
      %1026 = vmatpush1.msra.mxu0 0.0
      %1027 = vmatprep.subr.mxu0 0.0
      %1028 = vmatpush1.msra.mxu0 0.0
      %1029 = vmatprep.subr.mxu0 0.0
      %1030 = vmatpush1.msra.mxu0 0.0
      %1031 = vmatprep.subr.mxu0 0.0
      %1032 = vmatpush1.msra.mxu0 0.0
      %1033 = vmatprep.subr.mxu0 0.0
      %1034 = vmatpush1.msra.mxu0 0.0
      %1035 = vmatprep.subr.mxu0 0.0
      %1036 = vmatpush1.msra.mxu0 0.0
      %1037 = vmatprep.subr.mxu0 0.0
      %1038 = vmatpush1.msra.mxu0 0.0
      %1039 = vmatprep.subr.mxu0 0.0
      %1040 = vmatpush1.msra.mxu0 0.0
      %1041 = vmatprep.subr.mxu0 0.0
      %1042 = vmatpush1.msra.mxu0 0.0
      %1043 = vmatprep.subr.mxu0 0.0
      %1044 = vmatpush1.msra.mxu0 0.0
      %1045 = vmatprep.subr.mxu0 0.0
      %1046 = vmatpush1.msra.mxu0 0.0
      %1047 = vmatprep.mubr.f32.mxu0 0.0
      %1048 = vmatmul.mubr.f32.gmra.mrb[0].mxu0 %v828
      %v1049 = vpop.f32.mrb[0].mxu0
      %v1050 = vadd.f32 0.0, %v1049
      %v1051 = vpop.f32.mrb[0].mxu0
      %1052 = vmatprep.mubr.f32.mxu0 0.0
      %1053 = vmatmul.mubr.f32.gmra.mrb[0].mxu0 %v830
      %v1054 = vpop.f32.mrb[0].mxu0
      %v1055 = vadd.f32 0.0, %v1054
      %v1056 = vpop.f32.mrb[0].mxu0
      %1057 = vmatprep.mubr.f32.mxu0 0.0
      %1058 = vmatmul.mubr.f32.gmra.mrb[0].mxu0 %v832
      %v1059 = vpop.f32.mrb[0].mxu0
      %v1060 = vadd.f32 0.0, %v1059
      %v1061 = vpop.f32.mrb[0].mxu0
      %1062 = vmatprep.mubr.f32.mxu0 0.0
      %1063 = vmatmul.mubr.f32.gmra.mrb[0].mxu0 %v834
      %v1064 = vpop.f32.mrb[0].mxu0
      %v1065 = vadd.f32 0.0, %v1064
      %v1066 = vpop.f32.mrb[0].mxu0
      %1067 = vmatprep.mubr.f32.mxu0 0.0
      %1068 = vmatmul.mubr.f32.gmra.mrb[0].mxu0 %v836
      %v1069 = vpop.f32.mrb[0].mxu0
      %v1070 = vadd.f32 0.0, %v1069
      %v1071 = vpop.f32.mrb[0].mxu0
      %1072 = vmatprep.mubr.f32.mxu0 0.0
      %1073 = vmatmul.mubr.f32.gmra.mrb[0].mxu0 %v973
      %v1074 = vpop.f32.mrb[0].mxu0
      %v1075 = vadd.f32 0.0, %v1074
      %v1076 = vpop.f32.mrb[0].mxu0
      %1077 = vmatprep.mubr.f32.mxu0 0.0
      %1078 = vmatmul.mubr.f32.gmra.mrb[0].mxu0 %v975
      %v1079 = vpop.f32.mrb[0].mxu0
      %v1080 = vadd.f32 0.0, %v1079
      %v1081 = vpop.f32.mrb[0].mxu0
      %1082 = vmatprep.mubr.f32.mxu0 0.0
      %1083 = vmatmul.mubr.f32.gmra.mrb[0].mxu0 %v977
      %v1084 = vpop.f32.mrb[0].mxu0
      %v1085 = vadd.f32 0.0, %v1084
      %v1086 = vpop.f32.mrb[0].mxu0
      %1087 = vmatprep.mubr.f32.mxu0 0.0
      %1088 = vmatmul.mubr.f32.gmra.mrb[0].mxu0 %v979
      %v1089 = vpop.f32.mrb[0].mxu0
      %v1090 = vadd.f32 0.0, %v1089
      %v1091 = vpop.f32.mrb[0].mxu0
      %1092 = vmatprep.mubr.f32.mxu0 0.0
      %1093 = vmatmul.mubr.f32.gmra.mrb[0].mxu0 %v981
      %v1094 = vpop.f32.mrb[0].mxu0
      %v1095 = vadd.f32 0.0, %v1094
      %v1096 = vpop.f32.mrb[0].mxu0
      %1097 = vdwg.mxu0
      %v1098 = vadd.f32 %v905, %v1050
      %v1099 = vadd.f32 %v910, %v1055
      %v1100 = vadd.f32 %v915, %v1060
      %v1101 = vadd.f32 %v920, %v1065
      %v1102 = vadd.f32 %v925, %v1070
      %v1103 = vadd.f32 %v930, %v1075
      %v1104 = vadd.f32 %v935, %v1080
      %v1105 = vadd.f32 %v940, %v1085
      %v1106 = vadd.f32 %v945, %v1090
      %v1107 = vadd.f32 %v950, %v1095
      %v1108 = vld [vmem:[%s3] sm:$0x1]
      %v1110 = vlaneseq
      %v1111 = vshrl.u32 %v1110, 7
      %v1112 = vsub.s32 0, %v1111
      %v1113 = vrot.slane %v1108, %v1112
      %v1115 = vadd.f32 %v1098, %v1113
      %v1116 = vadd.f32 %v1099, %v1113
      %v1117 = vadd.f32 %v1100, %v1113
      %v1118 = vadd.f32 %v1101, %v1113
      %v1119 = vadd.f32 %v1102, %v1113
      %v1120 = vadd.f32 %v1103, %v1113
      %v1121 = vadd.f32 %v1104, %v1113
      %v1122 = vadd.f32 %v1105, %v1113
      %v1123 = vadd.f32 %v1106, %v1113
      %v1124 = vadd.f32 %v1107, %v1113
      %vm1125 = vcmp.gt.f32.partialorder %v1115, 0.0
      %vm1126 = vcmp.gt.f32.partialorder %v1116, 0.0
      %vm1127 = vcmp.gt.f32.partialorder %v1117, 0.0
      %vm1128 = vcmp.gt.f32.partialorder %v1118, 0.0
      %vm1129 = vcmp.gt.f32.partialorder %v1119, 0.0
      %vm1130 = vcmp.gt.f32.partialorder %v1120, 0.0
      %vm1131 = vcmp.gt.f32.partialorder %v1121, 0.0
      %vm1132 = vcmp.gt.f32.partialorder %v1122, 0.0
      %vm1133 = vcmp.gt.f32.partialorder %v1123, 0.0
      %vm1134 = vcmp.gt.f32.partialorder %v1124, 0.0
      %v1135 = vmin.f32 %v1115, 0.0
      %v1136 = vmin.f32 %v1116, 0.0
      %v1137 = vmin.f32 %v1117, 0.0
      %v1138 = vmin.f32 %v1118, 0.0
      %v1139 = vmin.f32 %v1119, 0.0
      %v1140 = vmin.f32 %v1120, 0.0
      %v1141 = vmin.f32 %v1121, 0.0
      %v1142 = vmin.f32 %v1122, 0.0
      %v1143 = vmin.f32 %v1123, 0.0
      %v1144 = vmin.f32 %v1124, 0.0
      %v1145 = vmul.f32 %v1135, 1.442695
      %v1146 = vpow.pop %v1145
      %v1147 = vmul.f32 %v1136, 1.442695
      %v1148 = vpow.pop %v1147
      %v1149 = vmul.f32 %v1137, 1.442695
      %v1150 = vpow.pop %v1149
      %v1151 = vmul.f32 %v1138, 1.442695
      %v1152 = vpow.pop %v1151
      %v1153 = vmul.f32 %v1139, 1.442695
      %v1154 = vpow.pop %v1153
      %v1155 = vmul.f32 %v1140, 1.442695
      %v1156 = vpow.pop %v1155
      %v1157 = vmul.f32 %v1141, 1.442695
      %v1158 = vpow.pop %v1157
      %v1159 = vmul.f32 %v1142, 1.442695
      %v1160 = vpow.pop %v1159
      %v1161 = vmul.f32 %v1143, 1.442695
      %v1162 = vpow.pop %v1161
      %v1163 = vmul.f32 %v1144, 1.442695
      %v1164 = vpow.pop %v1163
      %v1165 = vsub.f32 %v1146, 1.0
      %v1166 = vsub.f32 %v1148, 1.0
      %v1167 = vsub.f32 %v1150, 1.0
      %v1168 = vsub.f32 %v1152, 1.0
      %v1169 = vsub.f32 %v1154, 1.0
      %v1170 = vsub.f32 %v1156, 1.0
      %v1171 = vsub.f32 %v1158, 1.0
      %v1172 = vsub.f32 %v1160, 1.0
      %v1173 = vsub.f32 %v1162, 1.0
      %v1174 = vsub.f32 %v1164, 1.0
      %v1175 = vsel %vm1125, %v1115, %v1165
      %v1176 = vsel %vm1126, %v1116, %v1166
      %v1177 = vsel %vm1127, %v1117, %v1167
      %v1178 = vsel %vm1128, %v1118, %v1168
      %v1179 = vsel %vm1129, %v1119, %v1169
      %v1180 = vsel %vm1130, %v1120, %v1170
      %v1181 = vsel %vm1131, %v1121, %v1171
      %v1182 = vsel %vm1132, %v1122, %v1172
      %v1183 = vsel %vm1133, %v1123, %v1173
      %v1184 = vsel %vm1134, %v1124, %v1174
      %v1195 = vcombine.high %v1175, %v1175
      %v1196 = vcombine.high %v1176, %v1176
      %v1197 = vcombine.high %v1177, %v1177
      %v1198 = vcombine.high %v1178, %v1178
      %v1199 = vcombine.high %v1179, %v1179
      %v1200 = vcombine.high %v1180, %v1180
      %v1201 = vcombine.high %v1181, %v1181
      %v1202 = vcombine.high %v1182, %v1182
      %v1203 = vcombine.high %v1183, %v1183
      %v1204 = vcombine.high %v1184, %v1184
      %v1207 = vcombine.low %v1175, %v1195
      %v1208 = vcombine.low %v1176, %v1196
      %v1209 = vcombine.low %v1197, %v1178
      %v1210 = vcombine.low %v1198, %v1179
      %v1211 = vcombine.low %v1180, %v1200
      %v1212 = vcombine.low %v1181, %v1201
      %v1213 = vcombine.low %v1202, %v1183
      %v1214 = vcombine.low %v1203, %v1184
      %vm1223 = vcmask 261120
      %1224 = vst.msk [vmem:[%s274] sm:$0xff] %vm1223, %v1207
      %1225 = vst.msk [vmem:[%s274 + $0x8] sm:$0xff] %vm1223, %v1208
      %vm1226 = vcmask 257024
      %1227 = vst.msk [vmem:[%s274 + $0x10] sm:$0xf] %vm1226, %v1177
      %1228 = vst.msk [vmem:[%s274 + $0x18] sm:$0xff] %vm1223, %v1209
      %1229 = vst.msk [vmem:[%s274 + $0x20] sm:$0xff] %vm1223, %v1210
      %1230 = vst.msk [vmem:[%s274 + $0x28] sm:$0xf] %vm1226, %v1199
      %1231 = vst.msk [vmem:[%s274 + $0x30] sm:$0xff] %vm1223, %v1211
      %1232 = vst.msk [vmem:[%s274 + $0x38] sm:$0xff] %vm1223, %v1212
      %1233 = vst.msk [vmem:[%s274 + $0x40] sm:$0xf] %vm1226, %v1182
      %1234 = vst.msk [vmem:[%s274 + $0x48] sm:$0xff] %vm1223, %v1213
      %1235 = vst.msk [vmem:[%s274 + $0x50] sm:$0xff] %vm1223, %v1214
      %1236 = vst.msk [vmem:[%s274 + $0x58] sm:$0xf] %vm1226, %v1204
      %s1237 = smul.u32 4, %s20
      %p1238 = scmp.lt.s32.totalorder %s19, 1
      %s1239 = scalar_select %p1238, %s19, 1
      %p1240 = scmp.lt.s32.totalorder %s1237, 11
      %s1241 = scalar_select %p1240, %s1237, 11
      %s1242 = smul.addr %s1241, 3
      %s1243 = smul.addr %s1239, 36
      %s1244 = sadd.s32 %s1242, %s1243
      %s1245 = smul.addr %s1244, 8
      %s1246 = scalar_lea.vmem %s4, %s1245
      // Predicated region
      $region37: #{tpu_custom_call.1} parent=35 // pred_check
        %p1247 = pneg %p147
      $region38: #{tpu_custom_call.1} parent=35 // pred_check_branch
        %1249 = sbr.rel (%p1247) target = $region40
      $region39: #{tpu_custom_call.1} parent=35 // pred_region
        %s1250 = smul.u32 4, %s20
      $region40: #{tpu_custom_call.1} parent=35 // pred_fallthru
        _
    $region36: #{tpu_custom_call.1} parent=5 // pred_fallthru
      _
    %p1251 = scmp.le.s32.totalorder 2, %s10
    // Predicated region
    $region41: #{tpu_custom_call.1} parent=5 // pred_check
      %p1252 = pneg %p1251
    $region42: #{tpu_custom_call.1} parent=5 // pred_check_branch
      %1254 = sbr.rel (%p1252) target = $region44
    $region43: #{tpu_custom_call.1} parent=5 // pred_region
      %s1255 = ssub.s32 %s10, 2
      // Predicated region
      $region45: #{tpu_custom_call.1} parent=43 // pred_check
        %p1256 = pneg %p153
      $region46: #{tpu_custom_call.1} parent=43 // pred_check_branch
        %1258 = sbr.rel (%p1256) target = $region48
      $region47: #{tpu_custom_call.1} parent=43 // pred_region
        %s1259 = smul.u32 4, %s22
        %p1260 = scmp.lt.s32.totalorder %s21, 1
        %s1261 = scalar_select %p1260, %s21, 1
        %p1262 = scmp.lt.s32.totalorder %s1259, 11
        %s1263 = scalar_select %p1262, %s1259, 11
        %s1264 = smul.addr %s1263, 3
        %s1265 = smul.addr %s1261, 36
        %s1266 = sadd.s32 %s1264, %s1265
        %s1267 = smul.addr %s1266, 8
        %s1268 = scalar_lea.vmem %s4, %s1267
      $region48: #{tpu_custom_call.1} parent=43 // pred_fallthru
        _
    $region44: #{tpu_custom_call.1} parent=5 // pred_fallthru
      _
  $region6: #{tpu_custom_call.1} parent=0 // loop_footer
    %s14 = sadd.s32 1, %s10
  $region7: #{tpu_custom_call.1} parent=0 // loop_footer_branch
    %9 = sbr.rel target = $region3
  $region8: #{tpu_custom_call.1} parent=0 // loop_exit
    _

</llo_original>
